<compile_context>
chip_gen: v7x
topology: tpu7x:2x2x1
jax: 0.10.0
libtpu: 0.0.40
codegen_flags: <defaults>
</compile_context>

<pallas_src>
import numpy as np
import jax
import jax.numpy as jnp
from jax import lax
from jax.experimental import pallas as pl
from jax.experimental.pallas import tpu as pltpu

# --- config (small, consistent with the module) -----------------------------
SIZE_PCA_NUM = 4            # config.SIZE_PCA_NUM
SIZE_EXP_NODE_FEATURE = 32  # config.SIZE_EXP_NODE_FEATURE
NUM_VARS = 6                # len(self.vars)
NUM_EXAMPLES = 8            # number of counter-examples -> LSTM sequence length
N_LSTM = 4                  # ['p', 'n', 'i_1', 'i_2']


# --- host-side PCA preprocessing (same algorithm as the PyTorch source) ------
def pca(X, k):
    # TODO(synk): np.linalg.eig has no Pallas equivalent; PCA stays on host,
    # exactly like the PyTorch forward (it runs in numpy there too).
    X = np.asarray(X, dtype=np.float64)
    n_samples, n_features = X.shape
    mean = np.array([np.mean(X[:, i]) for i in range(n_features)])
    norm_X = X - mean
    scatter_matrix = np.dot(np.transpose(norm_X), norm_X)
    eig_val, eig_vec = np.linalg.eig(scatter_matrix)
    eig_pairs = [(np.abs(eig_val[i]), eig_vec[:, i]) for i in range(n_features)]
    eig_pairs.sort(reverse=True, key=lambda x: x[0])
    while len(eig_pairs) < k:
        eig_pairs.append((0, np.zeros(n_features)))
    feature = np.array([ele[1] for ele in eig_pairs[:k]])
    data = np.dot(norm_X, np.transpose(feature))
    return np.real(data)


# --- the single fused Pallas kernel ------------------------------------------
def _ce_embedding_kernel(xbd_ref, wih0_ref, whh0_ref, b0_ref,
                         w1_ref, b1_ref, mh0_ref, m1_ref, att_ref, out_ref):
    H = att_ref.shape[1]                 # 32
    N = b0_ref.shape[0]                  # 4 stacked LSTMs
    S = xbd_ref.shape[0] // N            # sequence length (static)

    xbd = xbd_ref[...]                   # (N*S, N*I)  block-diag input rows
    wih0 = wih0_ref[...]                 # (N*I, 4H)
    whh0 = whh0_ref[...]                 # (N*H, 4H)
    b0 = b0_ref[...]                     # (N, 4H)
    w1 = w1_ref[...]                     # (N*2H, 4H)  rows [wih1_n; whh1_n]
    b1 = b1_ref[...]                     # (N, 4H)
    mh0 = mh0_ref[...]                   # (N, N*H)    block-diag mask, width H
    m1 = m1_ref[...]                     # (N, N*2H)   block-diag mask, width 2H
    att = att_ref[...]                   # (1, H)

    # Layer-0 input contributions for ALL timesteps in one matmul (off the
    # serial recurrence path).  Row t*N+n -> x_t of LSTM n.
    gx0 = jnp.dot(xbd, wih0, preferred_element_type=jnp.float32)   # (N*S, 4H)

    def gates(pre):
        # gate columns reordered host-side to [i, f, o | g]
        s = jax.nn.sigmoid(pre[:, :3 * H])     # one sigmoid over a (4, 3H) block
        g = jnp.tanh(pre[:, 3 * H:])           # one tanh over the (4, H) block
        return s[:, :H], s[:, H:2 * H], s[:, 2 * H:3 * H], g

    h0 = c0 = h1 = c1 = jnp.zeros((N, H), jnp.float32)

    # fully unrolled S=8 recurrence: static trip count the scheduler sees through
    for t in range(S):
        # ---- layer 0: block-diag LHS => single (4, 4H) x (4H, 4H) MXU matmul
        h0_bd = jnp.concatenate([h0, h0, h0, h0], axis=1) * mh0        # (4, 4H)
        g0 = (gx0[N * t:N * t + N, :] + b0
              + jnp.dot(h0_bd, whh0, preferred_element_type=jnp.float32))
        i0, f0, o0, gg0 = gates(g0)
        c0 = f0 * c0 + i0 * gg0
        h0 = o0 * jnp.tanh(c0)

        # ---- layer 1: fused [h0 | h1] input, single (4, 8H) x (8H, 4H) matmul
        xh1 = jnp.concatenate([h0, h1], axis=1)                        # (4, 2H)
        xh1_bd = jnp.concatenate([xh1, xh1, xh1, xh1], axis=1) * m1    # (4, 8H)
        g1 = b1 + jnp.dot(xh1_bd, w1, preferred_element_type=jnp.float32)
        i1, f1, o1, gg1 = gates(g1)
        c1 = f1 * c1 + i1 * gg1
        h1 = o1 * jnp.tanh(c1)

    # ---- fused attention epilogue on the (4, H) embeddings already in VMEM ----
    embs = h1                                                          # (4, H)
    dots = jnp.sum(embs * att, axis=1, keepdims=True)                  # (4, 1)
    esq = jnp.sum(embs * embs, axis=1, keepdims=True)                  # (4, 1)
    asq = jnp.sum(att * att, axis=1, keepdims=True)                    # (1, 1)
    # cos = dot / max(||e||*||a||, 1e-8)  via rsqrt on squared norms
    cos = dots * lax.rsqrt(jnp.maximum(esq * asq, 1e-16))              # (4, 1)

    m = jnp.max(cos, axis=0, keepdims=True)                            # (1, 1)
    e = jnp.exp(cos - m)                                               # (4, 1)
    s = jnp.sum(e, axis=0, keepdims=True)                              # (1, 1)
    r = pl.reciprocal(s, approx=True)
    r = r * (2.0 - s * r)                  # one Newton step -> near-exact 1/s
    w = e * r                              # softmax over the 4 embeddings
    out_ref[...] = jnp.sum(w * embs, axis=0, keepdims=True)            # (1, H)


def ce_embedding_call(x_bd, kp):
    H = kp['attvec'].shape[1]
    vmem = lambda: pl.BlockSpec(memory_space=pltpu.MemorySpace.VMEM)
    return pl.pallas_call(
        _ce_embedding_kernel,
        out_shape=jax.ShapeDtypeStruct((1, H), jnp.float32),
        in_specs=[vmem() for _ in range(9)],
        out_specs=vmem(),
    )(x_bd, kp['wih0cat'], kp['whh0cat'], kp['b0'], kp['w1cat'], kp['b1'],
      kp['mask_h0'], kp['mask_1'], kp['attvec'])


# --- parameter init (natural layout: pre-transposed, PyTorch gate order) ------
def init_params(key, n_lstm=N_LSTM, I=SIZE_PCA_NUM, H=SIZE_EXP_NODE_FEATURE):
    stdv = 1.0 / np.sqrt(H)
    keys = jax.random.split(key, 9)

    def u(k, shape):
        return jax.random.uniform(k, shape, jnp.float32, -stdv, stdv)

    wih0 = u(keys[0], (n_lstm, I, 4 * H))    # weight_ih_l0.T, gate order [i,f,g,o]
    whh0 = u(keys[1], (n_lstm, H, 4 * H))    # weight_hh_l0.T
    b0 = u(keys[2], (n_lstm, 4 * H)) + u(keys[3], (n_lstm, 4 * H))   # b_ih + b_hh
    wih1 = u(keys[4], (n_lstm, H, 4 * H))    # weight_ih_l1.T
    whh1 = u(keys[5], (n_lstm, H, 4 * H))    # weight_hh_l1.T
    b1 = u(keys[6], (n_lstm, 4 * H)) + u(keys[7], (n_lstm, 4 * H))
    attvec = jax.random.normal(keys[8], (1, H), jnp.float32)
    return dict(wih0=wih0, whh0=whh0, b0=b0, wih1=wih1, whh1=whh1, b1=b1,
                attvec=attvec)


# --- host-side packing for the kernel -----------------------------------------
def pack_kernel_params(params, n_lstm=N_LSTM, I=SIZE_PCA_NUM,
                       H=SIZE_EXP_NODE_FEATURE):
    def reorder(w):  # gate columns: [i, f, g, o] -> [i, f, o, g]
        return jnp.concatenate(
            [w[..., :2 * H], w[..., 3 * H:4 * H], w[..., 2 * H:3 * H]], axis=-1)

    wih0 = reorder(params['wih0'])                         # (N, I, 4H)
    whh0 = reorder(params['whh0'])                         # (N, H, 4H)
    wih1 = reorder(params['wih1'])                         # (N, H, 4H)
    whh1 = reorder(params['whh1'])                         # (N, H, 4H)

    wih0cat = wih0.reshape(n_lstm * I, 4 * H)              # (N*I, 4H)
    whh0cat = whh0.reshape(n_lstm * H, 4 * H)              # (N*H, 4H)
    w1cat = jnp.concatenate([wih1, whh1], axis=1).reshape(n_lstm * 2 * H, 4 * H)

    b0 = reorder(params['b0'])                             # (N, 4H)
    b1 = reorder(params['b1'])                             # (N, 4H)

    lane0 = np.arange(n_lstm * H) // H
    mask_h0 = jnp.asarray(
        (lane0[None, :] == np.arange(n_lstm)[:, None]).astype(np.float32))
    lane1 = np.arange(n_lstm * 2 * H) // (2 * H)
    mask_1 = jnp.asarray(
        (lane1[None, :] == np.arange(n_lstm)[:, None]).astype(np.float32))

    return dict(wih0cat=wih0cat, whh0cat=whh0cat, b0=b0,
                w1cat=w1cat, b1=b1, mask_h0=mask_h0, mask_1=mask_1,
                attvec=params['attvec'])


def build_xbd(x_seq, I=SIZE_PCA_NUM):
    """x_seq: (N, S, I) -> block-diagonal rows (S*N, N*I); row t*N+n holds
    x_seq[n, t] in column block n."""
    n, S, _ = x_seq.shape
    xb = np.zeros((S, n, n, I), np.float32)
    for k in range(n):
        xb[:, k, k, :] = x_seq[k]
    return xb.reshape(S * n, n * I)


# --- full forward (mirrors CEEmbedding.forward) --------------------------------
def ce_embedding_forward(kparams, matx_p, matx_n, matx_i1, matx_i2):
    seqs = [np.asarray(pca(m, SIZE_PCA_NUM), dtype=np.float32)
            for m in (matx_p, matx_n, matx_i1, matx_i2)]
    x_seq = np.stack(seqs, axis=0)                    # (4, S, PCA), batch=1 squeezed
    x_bd = jnp.asarray(build_xbd(x_seq))              # (S*4, 4*PCA)
    return ce_embedding_call(x_bd, kparams)           # (1, H)


# --- pure-JAX reference for verification ---------------------------------------
def _ref_forward(params, x_seq):
    H = SIZE_EXP_NODE_FEATURE

    def lstm2(xs, wih0, whh0, b0, wih1, whh1, b1):
        def cell(x_t, h, c, wih, whh, b):
            g = x_t @ wih + h @ whh + b
            i = jax.nn.sigmoid(g[:, :H]); f = jax.nn.sigmoid(g[:, H:2 * H])
            gg = jnp.tanh(g[:, 2 * H:3 * H]); o = jax.nn.sigmoid(g[:, 3 * H:])
            c = f * c + i * gg
            return o * jnp.tanh(c), c
        h0 = c0 = h1 = c1 = jnp.zeros((1, H), jnp.float32)
        for t in range(xs.shape[0]):
            h0, c0 = cell(xs[t:t + 1], h0, c0, wih0, whh0, b0)
            h1, c1 = cell(h0, h1, c1, wih1, whh1, b1)
        return h1

    embs = jnp.concatenate([
        lstm2(x_seq[k], params['wih0'][k], params['whh0'][k], params['b0'][k:k + 1],
              params['wih1'][k], params['whh1'][k], params['b1'][k:k + 1])
        for k in range(4)], axis=0)                    # (4, H)
    att = params['attvec']
    eps = 1e-8
    cos = jnp.sum(embs * att, 1) / jnp.maximum(
        jnp.linalg.norm(embs, axis=1) * jnp.linalg.norm(att, axis=1), eps)
    w = jax.nn.softmax(cos.reshape(1, 4), axis=1)
    return w @ embs


if __name__ == "__main__":
    key = jax.random.PRNGKey(0)
    kp_, kn_, ki1_, ki2_, kparam = jax.random.split(key, 5)

    # synthetic integer counter-example matrices (what matxlize would produce)
    matx_p = np.asarray(jax.random.randint(kp_, (NUM_EXAMPLES, NUM_VARS), -10, 10))
    matx_n = np.asarray(jax.random.randint(kn_, (NUM_EXAMPLES, NUM_VARS), -10, 10))
    matx_i1 = np.asarray(jax.random.randint(ki1_, (NUM_EXAMPLES, NUM_VARS), -10, 10))
    matx_i2 = np.asarray(jax.random.randint(ki2_, (NUM_EXAMPLES, NUM_VARS), -10, 10))

    params = init_params(kparam)
    kparams = pack_kernel_params(params)

    ce_emb = ce_embedding_forward(kparams, matx_p, matx_n, matx_i1, matx_i2)
    ce_emb = jax.block_until_ready(ce_emb)
    assert ce_emb.shape == (1, SIZE_EXP_NODE_FEATURE)

    # verify against a pure-JAX reference (natural / PyTorch-ordered params)
    x_seq = jnp.asarray(np.stack(
        [np.asarray(pca(m, SIZE_PCA_NUM), dtype=np.float32)
         for m in (matx_p, matx_n, matx_i1, matx_i2)], axis=0))
    ref = jax.block_until_ready(_ref_forward(params, x_seq))
    np.testing.assert_allclose(np.asarray(ce_emb), np.asarray(ref),
                               rtol=1e-3, atol=1e-3)

    print("KERNEL_OK")
</pallas_src>

<mosaic_0001>
module attributes {stable_mosaic.version = 11 : i64} {
  func.func @_ce_embedding_kernel(%arg0: memref<32x16xf32, #tpu.memory_space<vmem>>, %arg1: memref<16x128xf32, #tpu.memory_space<vmem>>, %arg2: memref<128x128xf32, #tpu.memory_space<vmem>>, %arg3: memref<4x128xf32, #tpu.memory_space<vmem>>, %arg4: memref<256x128xf32, #tpu.memory_space<vmem>>, %arg5: memref<4x128xf32, #tpu.memory_space<vmem>>, %arg6: memref<4x128xf32, #tpu.memory_space<vmem>>, %arg7: memref<4x256xf32, #tpu.memory_space<vmem>>, %arg8: memref<1x32xf32, #tpu.memory_space<vmem>>, %arg9: memref<1x32xf32, #tpu.memory_space<vmem>>) attributes {dimension_semantics = [], scalar_prefetch = 0 : i64, scratch_operands = 0 : i64, tpu.core_type = #tpu.core_type<tc>} {
    %c0 = arith.constant 0 : index
    %c0_0 = arith.constant 0 : index
    %0 = vector.load %arg0[%c0, %c0_0] : memref<32x16xf32, #tpu.memory_space<vmem>>, vector<32x16xf32>
    %c0_1 = arith.constant 0 : index
    %c0_2 = arith.constant 0 : index
    %1 = vector.load %arg1[%c0_1, %c0_2] : memref<16x128xf32, #tpu.memory_space<vmem>>, vector<16x128xf32>
    %c0_3 = arith.constant 0 : index
    %c0_4 = arith.constant 0 : index
    %2 = vector.load %arg2[%c0_3, %c0_4] : memref<128x128xf32, #tpu.memory_space<vmem>>, vector<128x128xf32>
    %c0_5 = arith.constant 0 : index
    %c0_6 = arith.constant 0 : index
    %3 = vector.load %arg3[%c0_5, %c0_6] : memref<4x128xf32, #tpu.memory_space<vmem>>, vector<4x128xf32>
    %c0_7 = arith.constant 0 : index
    %c0_8 = arith.constant 0 : index
    %4 = vector.load %arg4[%c0_7, %c0_8] : memref<256x128xf32, #tpu.memory_space<vmem>>, vector<256x128xf32>
    %c0_9 = arith.constant 0 : index
    %c0_10 = arith.constant 0 : index
    %5 = vector.load %arg5[%c0_9, %c0_10] : memref<4x128xf32, #tpu.memory_space<vmem>>, vector<4x128xf32>
    %c0_11 = arith.constant 0 : index
    %c0_12 = arith.constant 0 : index
    %6 = vector.load %arg6[%c0_11, %c0_12] : memref<4x128xf32, #tpu.memory_space<vmem>>, vector<4x128xf32>
    %c0_13 = arith.constant 0 : index
    %c0_14 = arith.constant 0 : index
    %7 = vector.load %arg7[%c0_13, %c0_14] : memref<4x256xf32, #tpu.memory_space<vmem>>, vector<4x256xf32>
    %c0_15 = arith.constant 0 : index
    %c0_16 = arith.constant 0 : index
    %8 = vector.load %arg8[%c0_15, %c0_16] : memref<1x32xf32, #tpu.memory_space<vmem>>, vector<1x32xf32>
    %cst = arith.constant dense<0.000000e+00> : vector<32x128xf32>
    %9 = tpu.matmul %0, %1, %cst {dimension_numbers = #tpu.dot_dimension_numbers<[1], [0], [0], [1], [0, 0, 1, 1], [], []>} : vector<32x16xf32>, vector<16x128xf32>, vector<32x128xf32> -> vector<32x128xf32>
    %cst_17 = arith.constant 0.000000e+00 : f32
    %10 = vector.broadcast %cst_17 : f32 to vector<4x32xf32>
    %11 = tpu.concatenate %10, %10, %10, %10 in 1 : vector<4x32xf32>, vector<4x32xf32>, vector<4x32xf32>, vector<4x32xf32> -> vector<4x128xf32>
    %12 = arith.mulf %11, %6 : vector<4x128xf32>
    %13 = vector.extract_strided_slice %9 {offsets = [0, 0], sizes = [4, 128], strides = [1, 1]} : vector<32x128xf32> to vector<4x128xf32>
    %14 = arith.addf %13, %3 : vector<4x128xf32>
    %cst_18 = arith.constant dense<0.000000e+00> : vector<4x128xf32>
    %15 = tpu.matmul %12, %2, %cst_18 {dimension_numbers = #tpu.dot_dimension_numbers<[1], [0], [0], [1], [0, 0, 1, 1], [], []>} : vector<4x128xf32>, vector<128x128xf32>, vector<4x128xf32> -> vector<4x128xf32>
    %16 = arith.addf %14, %15 : vector<4x128xf32>
    %17 = vector.extract_strided_slice %16 {offsets = [0, 0], sizes = [4, 96], strides = [1, 1]} : vector<4x128xf32> to vector<4x96xf32>
    %18 = arith.negf %17 : vector<4x96xf32>
    %19 = math.exp %18 : vector<4x96xf32>
    %cst_19 = arith.constant 1.000000e+00 : f32
    %20 = vector.broadcast %cst_19 : f32 to vector<4x96xf32>
    %21 = arith.addf %20, %19 : vector<4x96xf32>
    %22 = arith.divf %20, %21 : vector<4x96xf32>
    %23 = vector.extract_strided_slice %16 {offsets = [0, 96], sizes = [4, 32], strides = [1, 1]} : vector<4x128xf32> to vector<4x32xf32>
    %24 = math.tanh %23 : vector<4x32xf32>
    %25 = vector.extract_strided_slice %22 {offsets = [0, 0], sizes = [4, 32], strides = [1, 1]} : vector<4x96xf32> to vector<4x32xf32>
    %26 = vector.extract_strided_slice %22 {offsets = [0, 32], sizes = [4, 32], strides = [1, 1]} : vector<4x96xf32> to vector<4x32xf32>
    %27 = vector.extract_strided_slice %22 {offsets = [0, 64], sizes = [4, 32], strides = [1, 1]} : vector<4x96xf32> to vector<4x32xf32>
    %28 = arith.mulf %26, %10 : vector<4x32xf32>
    %29 = arith.mulf %25, %24 : vector<4x32xf32>
    %30 = arith.addf %28, %29 : vector<4x32xf32>
    %31 = math.tanh %30 : vector<4x32xf32>
    %32 = arith.mulf %27, %31 : vector<4x32xf32>
    %33 = tpu.concatenate %32, %10 in 1 : vector<4x32xf32>, vector<4x32xf32> -> vector<4x64xf32>
    %34 = tpu.concatenate %33, %33, %33, %33 in 1 : vector<4x64xf32>, vector<4x64xf32>, vector<4x64xf32>, vector<4x64xf32> -> vector<4x256xf32>
    %35 = arith.mulf %34, %7 : vector<4x256xf32>
    %cst_20 = arith.constant dense<0.000000e+00> : vector<4x128xf32>
    %36 = tpu.matmul %35, %4, %cst_20 {dimension_numbers = #tpu.dot_dimension_numbers<[1], [0], [0], [1], [0, 0, 1, 1], [], []>} : vector<4x256xf32>, vector<256x128xf32>, vector<4x128xf32> -> vector<4x128xf32>
    %37 = arith.addf %5, %36 : vector<4x128xf32>
    %38 = vector.extract_strided_slice %37 {offsets = [0, 0], sizes = [4, 96], strides = [1, 1]} : vector<4x128xf32> to vector<4x96xf32>
    %39 = arith.negf %38 : vector<4x96xf32>
    %40 = math.exp %39 : vector<4x96xf32>
    %cst_21 = arith.constant 1.000000e+00 : f32
    %41 = vector.broadcast %cst_21 : f32 to vector<4x96xf32>
    %42 = arith.addf %41, %40 : vector<4x96xf32>
    %43 = arith.divf %41, %42 : vector<4x96xf32>
    %44 = vector.extract_strided_slice %37 {offsets = [0, 96], sizes = [4, 32], strides = [1, 1]} : vector<4x128xf32> to vector<4x32xf32>
    %45 = math.tanh %44 : vector<4x32xf32>
    %46 = vector.extract_strided_slice %43 {offsets = [0, 0], sizes = [4, 32], strides = [1, 1]} : vector<4x96xf32> to vector<4x32xf32>
    %47 = vector.extract_strided_slice %43 {offsets = [0, 32], sizes = [4, 32], strides = [1, 1]} : vector<4x96xf32> to vector<4x32xf32>
    %48 = vector.extract_strided_slice %43 {offsets = [0, 64], sizes = [4, 32], strides = [1, 1]} : vector<4x96xf32> to vector<4x32xf32>
    %49 = arith.mulf %47, %10 : vector<4x32xf32>
    %50 = arith.mulf %46, %45 : vector<4x32xf32>
    %51 = arith.addf %49, %50 : vector<4x32xf32>
    %52 = math.tanh %51 : vector<4x32xf32>
    %53 = arith.mulf %48, %52 : vector<4x32xf32>
    %54 = tpu.concatenate %32, %32, %32, %32 in 1 : vector<4x32xf32>, vector<4x32xf32>, vector<4x32xf32>, vector<4x32xf32> -> vector<4x128xf32>
    %55 = arith.mulf %54, %6 : vector<4x128xf32>
    %56 = vector.extract_strided_slice %9 {offsets = [4, 0], sizes = [4, 128], strides = [1, 1]} : vector<32x128xf32> to vector<4x128xf32>
    %57 = arith.addf %56, %3 : vector<4x128xf32>
    %cst_22 = arith.constant dense<0.000000e+00> : vector<4x128xf32>
    %58 = tpu.matmul %55, %2, %cst_22 {dimension_numbers = #tpu.dot_dimension_numbers<[1], [0], [0], [1], [0, 0, 1, 1], [], []>} : vector<4x128xf32>, vector<128x128xf32>, vector<4x128xf32> -> vector<4x128xf32>
    %59 = arith.addf %57, %58 : vector<4x128xf32>
    %60 = vector.extract_strided_slice %59 {offsets = [0, 0], sizes = [4, 96], strides = [1, 1]} : vector<4x128xf32> to vector<4x96xf32>
    %61 = arith.negf %60 : vector<4x96xf32>
    %62 = math.exp %61 : vector<4x96xf32>
    %cst_23 = arith.constant 1.000000e+00 : f32
    %63 = vector.broadcast %cst_23 : f32 to vector<4x96xf32>
    %64 = arith.addf %63, %62 : vector<4x96xf32>
    %65 = arith.divf %63, %64 : vector<4x96xf32>
    %66 = vector.extract_strided_slice %59 {offsets = [0, 96], sizes = [4, 32], strides = [1, 1]} : vector<4x128xf32> to vector<4x32xf32>
    %67 = math.tanh %66 : vector<4x32xf32>
    %68 = vector.extract_strided_slice %65 {offsets = [0, 0], sizes = [4, 32], strides = [1, 1]} : vector<4x96xf32> to vector<4x32xf32>
    %69 = vector.extract_strided_slice %65 {offsets = [0, 32], sizes = [4, 32], strides = [1, 1]} : vector<4x96xf32> to vector<4x32xf32>
    %70 = vector.extract_strided_slice %65 {offsets = [0, 64], sizes = [4, 32], strides = [1, 1]} : vector<4x96xf32> to vector<4x32xf32>
    %71 = arith.mulf %69, %30 : vector<4x32xf32>
    %72 = arith.mulf %68, %67 : vector<4x32xf32>
    %73 = arith.addf %71, %72 : vector<4x32xf32>
    %74 = math.tanh %73 : vector<4x32xf32>
    %75 = arith.mulf %70, %74 : vector<4x32xf32>
    %76 = tpu.concatenate %75, %53 in 1 : vector<4x32xf32>, vector<4x32xf32> -> vector<4x64xf32>
    %77 = tpu.concatenate %76, %76, %76, %76 in 1 : vector<4x64xf32>, vector<4x64xf32>, vector<4x64xf32>, vector<4x64xf32> -> vector<4x256xf32>
    %78 = arith.mulf %77, %7 : vector<4x256xf32>
    %cst_24 = arith.constant dense<0.000000e+00> : vector<4x128xf32>
    %79 = tpu.matmul %78, %4, %cst_24 {dimension_numbers = #tpu.dot_dimension_numbers<[1], [0], [0], [1], [0, 0, 1, 1], [], []>} : vector<4x256xf32>, vector<256x128xf32>, vector<4x128xf32> -> vector<4x128xf32>
    %80 = arith.addf %5, %79 : vector<4x128xf32>
    %81 = vector.extract_strided_slice %80 {offsets = [0, 0], sizes = [4, 96], strides = [1, 1]} : vector<4x128xf32> to vector<4x96xf32>
    %82 = arith.negf %81 : vector<4x96xf32>
    %83 = math.exp %82 : vector<4x96xf32>
    %cst_25 = arith.constant 1.000000e+00 : f32
    %84 = vector.broadcast %cst_25 : f32 to vector<4x96xf32>
    %85 = arith.addf %84, %83 : vector<4x96xf32>
    %86 = arith.divf %84, %85 : vector<4x96xf32>
    %87 = vector.extract_strided_slice %80 {offsets = [0, 96], sizes = [4, 32], strides = [1, 1]} : vector<4x128xf32> to vector<4x32xf32>
    %88 = math.tanh %87 : vector<4x32xf32>
    %89 = vector.extract_strided_slice %86 {offsets = [0, 0], sizes = [4, 32], strides = [1, 1]} : vector<4x96xf32> to vector<4x32xf32>
    %90 = vector.extract_strided_slice %86 {offsets = [0, 32], sizes = [4, 32], strides = [1, 1]} : vector<4x96xf32> to vector<4x32xf32>
    %91 = vector.extract_strided_slice %86 {offsets = [0, 64], sizes = [4, 32], strides = [1, 1]} : vector<4x96xf32> to vector<4x32xf32>
    %92 = arith.mulf %90, %51 : vector<4x32xf32>
    %93 = arith.mulf %89, %88 : vector<4x32xf32>
    %94 = arith.addf %92, %93 : vector<4x32xf32>
    %95 = math.tanh %94 : vector<4x32xf32>
    %96 = arith.mulf %91, %95 : vector<4x32xf32>
    %97 = tpu.concatenate %75, %75, %75, %75 in 1 : vector<4x32xf32>, vector<4x32xf32>, vector<4x32xf32>, vector<4x32xf32> -> vector<4x128xf32>
    %98 = arith.mulf %97, %6 : vector<4x128xf32>
    %99 = vector.extract_strided_slice %9 {offsets = [8, 0], sizes = [4, 128], strides = [1, 1]} : vector<32x128xf32> to vector<4x128xf32>
    %100 = arith.addf %99, %3 : vector<4x128xf32>
    %cst_26 = arith.constant dense<0.000000e+00> : vector<4x128xf32>
    %101 = tpu.matmul %98, %2, %cst_26 {dimension_numbers = #tpu.dot_dimension_numbers<[1], [0], [0], [1], [0, 0, 1, 1], [], []>} : vector<4x128xf32>, vector<128x128xf32>, vector<4x128xf32> -> vector<4x128xf32>
    %102 = arith.addf %100, %101 : vector<4x128xf32>
    %103 = vector.extract_strided_slice %102 {offsets = [0, 0], sizes = [4, 96], strides = [1, 1]} : vector<4x128xf32> to vector<4x96xf32>
    %104 = arith.negf %103 : vector<4x96xf32>
    %105 = math.exp %104 : vector<4x96xf32>
    %cst_27 = arith.constant 1.000000e+00 : f32
    %106 = vector.broadcast %cst_27 : f32 to vector<4x96xf32>
    %107 = arith.addf %106, %105 : vector<4x96xf32>
    %108 = arith.divf %106, %107 : vector<4x96xf32>
    %109 = vector.extract_strided_slice %102 {offsets = [0, 96], sizes = [4, 32], strides = [1, 1]} : vector<4x128xf32> to vector<4x32xf32>
    %110 = math.tanh %109 : vector<4x32xf32>
    %111 = vector.extract_strided_slice %108 {offsets = [0, 0], sizes = [4, 32], strides = [1, 1]} : vector<4x96xf32> to vector<4x32xf32>
    %112 = vector.extract_strided_slice %108 {offsets = [0, 32], sizes = [4, 32], strides = [1, 1]} : vector<4x96xf32> to vector<4x32xf32>
    %113 = vector.extract_strided_slice %108 {offsets = [0, 64], sizes = [4, 32], strides = [1, 1]} : vector<4x96xf32> to vector<4x32xf32>
    %114 = arith.mulf %112, %73 : vector<4x32xf32>
    %115 = arith.mulf %111, %110 : vector<4x32xf32>
    %116 = arith.addf %114, %115 : vector<4x32xf32>
    %117 = math.tanh %116 : vector<4x32xf32>
    %118 = arith.mulf %113, %117 : vector<4x32xf32>
    %119 = tpu.concatenate %118, %96 in 1 : vector<4x32xf32>, vector<4x32xf32> -> vector<4x64xf32>
    %120 = tpu.concatenate %119, %119, %119, %119 in 1 : vector<4x64xf32>, vector<4x64xf32>, vector<4x64xf32>, vector<4x64xf32> -> vector<4x256xf32>
    %121 = arith.mulf %120, %7 : vector<4x256xf32>
    %cst_28 = arith.constant dense<0.000000e+00> : vector<4x128xf32>
    %122 = tpu.matmul %121, %4, %cst_28 {dimension_numbers = #tpu.dot_dimension_numbers<[1], [0], [0], [1], [0, 0, 1, 1], [], []>} : vector<4x256xf32>, vector<256x128xf32>, vector<4x128xf32> -> vector<4x128xf32>
    %123 = arith.addf %5, %122 : vector<4x128xf32>
    %124 = vector.extract_strided_slice %123 {offsets = [0, 0], sizes = [4, 96], strides = [1, 1]} : vector<4x128xf32> to vector<4x96xf32>
    %125 = arith.negf %124 : vector<4x96xf32>
    %126 = math.exp %125 : vector<4x96xf32>
    %cst_29 = arith.constant 1.000000e+00 : f32
    %127 = vector.broadcast %cst_29 : f32 to vector<4x96xf32>
    %128 = arith.addf %127, %126 : vector<4x96xf32>
    %129 = arith.divf %127, %128 : vector<4x96xf32>
    %130 = vector.extract_strided_slice %123 {offsets = [0, 96], sizes = [4, 32], strides = [1, 1]} : vector<4x128xf32> to vector<4x32xf32>
    %131 = math.tanh %130 : vector<4x32xf32>
    %132 = vector.extract_strided_slice %129 {offsets = [0, 0], sizes = [4, 32], strides = [1, 1]} : vector<4x96xf32> to vector<4x32xf32>
    %133 = vector.extract_strided_slice %129 {offsets = [0, 32], sizes = [4, 32], strides = [1, 1]} : vector<4x96xf32> to vector<4x32xf32>
    %134 = vector.extract_strided_slice %129 {offsets = [0, 64], sizes = [4, 32], strides = [1, 1]} : vector<4x96xf32> to vector<4x32xf32>
    %135 = arith.mulf %133, %94 : vector<4x32xf32>
    %136 = arith.mulf %132, %131 : vector<4x32xf32>
    %137 = arith.addf %135, %136 : vector<4x32xf32>
    %138 = math.tanh %137 : vector<4x32xf32>
    %139 = arith.mulf %134, %138 : vector<4x32xf32>
    %140 = tpu.concatenate %118, %118, %118, %118 in 1 : vector<4x32xf32>, vector<4x32xf32>, vector<4x32xf32>, vector<4x32xf32> -> vector<4x128xf32>
    %141 = arith.mulf %140, %6 : vector<4x128xf32>
    %142 = vector.extract_strided_slice %9 {offsets = [12, 0], sizes = [4, 128], strides = [1, 1]} : vector<32x128xf32> to vector<4x128xf32>
    %143 = arith.addf %142, %3 : vector<4x128xf32>
    %cst_30 = arith.constant dense<0.000000e+00> : vector<4x128xf32>
    %144 = tpu.matmul %141, %2, %cst_30 {dimension_numbers = #tpu.dot_dimension_numbers<[1], [0], [0], [1], [0, 0, 1, 1], [], []>} : vector<4x128xf32>, vector<128x128xf32>, vector<4x128xf32> -> vector<4x128xf32>
    %145 = arith.addf %143, %144 : vector<4x128xf32>
    %146 = vector.extract_strided_slice %145 {offsets = [0, 0], sizes = [4, 96], strides = [1, 1]} : vector<4x128xf32> to vector<4x96xf32>
    %147 = arith.negf %146 : vector<4x96xf32>
    %148 = math.exp %147 : vector<4x96xf32>
    %cst_31 = arith.constant 1.000000e+00 : f32
    %149 = vector.broadcast %cst_31 : f32 to vector<4x96xf32>
    %150 = arith.addf %149, %148 : vector<4x96xf32>
    %151 = arith.divf %149, %150 : vector<4x96xf32>
    %152 = vector.extract_strided_slice %145 {offsets = [0, 96], sizes = [4, 32], strides = [1, 1]} : vector<4x128xf32> to vector<4x32xf32>
    %153 = math.tanh %152 : vector<4x32xf32>
    %154 = vector.extract_strided_slice %151 {offsets = [0, 0], sizes = [4, 32], strides = [1, 1]} : vector<4x96xf32> to vector<4x32xf32>
    %155 = vector.extract_strided_slice %151 {offsets = [0, 32], sizes = [4, 32], strides = [1, 1]} : vector<4x96xf32> to vector<4x32xf32>
    %156 = vector.extract_strided_slice %151 {offsets = [0, 64], sizes = [4, 32], strides = [1, 1]} : vector<4x96xf32> to vector<4x32xf32>
    %157 = arith.mulf %155, %116 : vector<4x32xf32>
    %158 = arith.mulf %154, %153 : vector<4x32xf32>
    %159 = arith.addf %157, %158 : vector<4x32xf32>
    %160 = math.tanh %159 : vector<4x32xf32>
    %161 = arith.mulf %156, %160 : vector<4x32xf32>
    %162 = tpu.concatenate %161, %139 in 1 : vector<4x32xf32>, vector<4x32xf32> -> vector<4x64xf32>
    %163 = tpu.concatenate %162, %162, %162, %162 in 1 : vector<4x64xf32>, vector<4x64xf32>, vector<4x64xf32>, vector<4x64xf32> -> vector<4x256xf32>
    %164 = arith.mulf %163, %7 : vector<4x256xf32>
    %cst_32 = arith.constant dense<0.000000e+00> : vector<4x128xf32>
    %165 = tpu.matmul %164, %4, %cst_32 {dimension_numbers = #tpu.dot_dimension_numbers<[1], [0], [0], [1], [0, 0, 1, 1], [], []>} : vector<4x256xf32>, vector<256x128xf32>, vector<4x128xf32> -> vector<4x128xf32>
    %166 = arith.addf %5, %165 : vector<4x128xf32>
    %167 = vector.extract_strided_slice %166 {offsets = [0, 0], sizes = [4, 96], strides = [1, 1]} : vector<4x128xf32> to vector<4x96xf32>
    %168 = arith.negf %167 : vector<4x96xf32>
    %169 = math.exp %168 : vector<4x96xf32>
    %cst_33 = arith.constant 1.000000e+00 : f32
    %170 = vector.broadcast %cst_33 : f32 to vector<4x96xf32>
    %171 = arith.addf %170, %169 : vector<4x96xf32>
    %172 = arith.divf %170, %171 : vector<4x96xf32>
    %173 = vector.extract_strided_slice %166 {offsets = [0, 96], sizes = [4, 32], strides = [1, 1]} : vector<4x128xf32> to vector<4x32xf32>
    %174 = math.tanh %173 : vector<4x32xf32>
    %175 = vector.extract_strided_slice %172 {offsets = [0, 0], sizes = [4, 32], strides = [1, 1]} : vector<4x96xf32> to vector<4x32xf32>
    %176 = vector.extract_strided_slice %172 {offsets = [0, 32], sizes = [4, 32], strides = [1, 1]} : vector<4x96xf32> to vector<4x32xf32>
    %177 = vector.extract_strided_slice %172 {offsets = [0, 64], sizes = [4, 32], strides = [1, 1]} : vector<4x96xf32> to vector<4x32xf32>
    %178 = arith.mulf %176, %137 : vector<4x32xf32>
    %179 = arith.mulf %175, %174 : vector<4x32xf32>
    %180 = arith.addf %178, %179 : vector<4x32xf32>
    %181 = math.tanh %180 : vector<4x32xf32>
    %182 = arith.mulf %177, %181 : vector<4x32xf32>
    %183 = tpu.concatenate %161, %161, %161, %161 in 1 : vector<4x32xf32>, vector<4x32xf32>, vector<4x32xf32>, vector<4x32xf32> -> vector<4x128xf32>
    %184 = arith.mulf %183, %6 : vector<4x128xf32>
    %185 = vector.extract_strided_slice %9 {offsets = [16, 0], sizes = [4, 128], strides = [1, 1]} : vector<32x128xf32> to vector<4x128xf32>
    %186 = arith.addf %185, %3 : vector<4x128xf32>
    %cst_34 = arith.constant dense<0.000000e+00> : vector<4x128xf32>
    %187 = tpu.matmul %184, %2, %cst_34 {dimension_numbers = #tpu.dot_dimension_numbers<[1], [0], [0], [1], [0, 0, 1, 1], [], []>} : vector<4x128xf32>, vector<128x128xf32>, vector<4x128xf32> -> vector<4x128xf32>
    %188 = arith.addf %186, %187 : vector<4x128xf32>
    %189 = vector.extract_strided_slice %188 {offsets = [0, 0], sizes = [4, 96], strides = [1, 1]} : vector<4x128xf32> to vector<4x96xf32>
    %190 = arith.negf %189 : vector<4x96xf32>
    %191 = math.exp %190 : vector<4x96xf32>
    %cst_35 = arith.constant 1.000000e+00 : f32
    %192 = vector.broadcast %cst_35 : f32 to vector<4x96xf32>
    %193 = arith.addf %192, %191 : vector<4x96xf32>
    %194 = arith.divf %192, %193 : vector<4x96xf32>
    %195 = vector.extract_strided_slice %188 {offsets = [0, 96], sizes = [4, 32], strides = [1, 1]} : vector<4x128xf32> to vector<4x32xf32>
    %196 = math.tanh %195 : vector<4x32xf32>
    %197 = vector.extract_strided_slice %194 {offsets = [0, 0], sizes = [4, 32], strides = [1, 1]} : vector<4x96xf32> to vector<4x32xf32>
    %198 = vector.extract_strided_slice %194 {offsets = [0, 32], sizes = [4, 32], strides = [1, 1]} : vector<4x96xf32> to vector<4x32xf32>
    %199 = vector.extract_strided_slice %194 {offsets = [0, 64], sizes = [4, 32], strides = [1, 1]} : vector<4x96xf32> to vector<4x32xf32>
    %200 = arith.mulf %198, %159 : vector<4x32xf32>
    %201 = arith.mulf %197, %196 : vector<4x32xf32>
    %202 = arith.addf %200, %201 : vector<4x32xf32>
    %203 = math.tanh %202 : vector<4x32xf32>
    %204 = arith.mulf %199, %203 : vector<4x32xf32>
    %205 = tpu.concatenate %204, %182 in 1 : vector<4x32xf32>, vector<4x32xf32> -> vector<4x64xf32>
    %206 = tpu.concatenate %205, %205, %205, %205 in 1 : vector<4x64xf32>, vector<4x64xf32>, vector<4x64xf32>, vector<4x64xf32> -> vector<4x256xf32>
    %207 = arith.mulf %206, %7 : vector<4x256xf32>
    %cst_36 = arith.constant dense<0.000000e+00> : vector<4x128xf32>
    %208 = tpu.matmul %207, %4, %cst_36 {dimension_numbers = #tpu.dot_dimension_numbers<[1], [0], [0], [1], [0, 0, 1, 1], [], []>} : vector<4x256xf32>, vector<256x128xf32>, vector<4x128xf32> -> vector<4x128xf32>
    %209 = arith.addf %5, %208 : vector<4x128xf32>
    %210 = vector.extract_strided_slice %209 {offsets = [0, 0], sizes = [4, 96], strides = [1, 1]} : vector<4x128xf32> to vector<4x96xf32>
    %211 = arith.negf %210 : vector<4x96xf32>
    %212 = math.exp %211 : vector<4x96xf32>
    %cst_37 = arith.constant 1.000000e+00 : f32
    %213 = vector.broadcast %cst_37 : f32 to vector<4x96xf32>
    %214 = arith.addf %213, %212 : vector<4x96xf32>
    %215 = arith.divf %213, %214 : vector<4x96xf32>
    %216 = vector.extract_strided_slice %209 {offsets = [0, 96], sizes = [4, 32], strides = [1, 1]} : vector<4x128xf32> to vector<4x32xf32>
    %217 = math.tanh %216 : vector<4x32xf32>
    %218 = vector.extract_strided_slice %215 {offsets = [0, 0], sizes = [4, 32], strides = [1, 1]} : vector<4x96xf32> to vector<4x32xf32>
    %219 = vector.extract_strided_slice %215 {offsets = [0, 32], sizes = [4, 32], strides = [1, 1]} : vector<4x96xf32> to vector<4x32xf32>
    %220 = vector.extract_strided_slice %215 {offsets = [0, 64], sizes = [4, 32], strides = [1, 1]} : vector<4x96xf32> to vector<4x32xf32>
    %221 = arith.mulf %219, %180 : vector<4x32xf32>
    %222 = arith.mulf %218, %217 : vector<4x32xf32>
    %223 = arith.addf %221, %222 : vector<4x32xf32>
    %224 = math.tanh %223 : vector<4x32xf32>
    %225 = arith.mulf %220, %224 : vector<4x32xf32>
    %226 = tpu.concatenate %204, %204, %204, %204 in 1 : vector<4x32xf32>, vector<4x32xf32>, vector<4x32xf32>, vector<4x32xf32> -> vector<4x128xf32>
    %227 = arith.mulf %226, %6 : vector<4x128xf32>
    %228 = vector.extract_strided_slice %9 {offsets = [20, 0], sizes = [4, 128], strides = [1, 1]} : vector<32x128xf32> to vector<4x128xf32>
    %229 = arith.addf %228, %3 : vector<4x128xf32>
    %cst_38 = arith.constant dense<0.000000e+00> : vector<4x128xf32>
    %230 = tpu.matmul %227, %2, %cst_38 {dimension_numbers = #tpu.dot_dimension_numbers<[1], [0], [0], [1], [0, 0, 1, 1], [], []>} : vector<4x128xf32>, vector<128x128xf32>, vector<4x128xf32> -> vector<4x128xf32>
    %231 = arith.addf %229, %230 : vector<4x128xf32>
    %232 = vector.extract_strided_slice %231 {offsets = [0, 0], sizes = [4, 96], strides = [1, 1]} : vector<4x128xf32> to vector<4x96xf32>
    %233 = arith.negf %232 : vector<4x96xf32>
    %234 = math.exp %233 : vector<4x96xf32>
    %cst_39 = arith.constant 1.000000e+00 : f32
    %235 = vector.broadcast %cst_39 : f32 to vector<4x96xf32>
    %236 = arith.addf %235, %234 : vector<4x96xf32>
    %237 = arith.divf %235, %236 : vector<4x96xf32>
    %238 = vector.extract_strided_slice %231 {offsets = [0, 96], sizes = [4, 32], strides = [1, 1]} : vector<4x128xf32> to vector<4x32xf32>
    %239 = math.tanh %238 : vector<4x32xf32>
    %240 = vector.extract_strided_slice %237 {offsets = [0, 0], sizes = [4, 32], strides = [1, 1]} : vector<4x96xf32> to vector<4x32xf32>
    %241 = vector.extract_strided_slice %237 {offsets = [0, 32], sizes = [4, 32], strides = [1, 1]} : vector<4x96xf32> to vector<4x32xf32>
    %242 = vector.extract_strided_slice %237 {offsets = [0, 64], sizes = [4, 32], strides = [1, 1]} : vector<4x96xf32> to vector<4x32xf32>
    %243 = arith.mulf %241, %202 : vector<4x32xf32>
    %244 = arith.mulf %240, %239 : vector<4x32xf32>
    %245 = arith.addf %243, %244 : vector<4x32xf32>
    %246 = math.tanh %245 : vector<4x32xf32>
    %247 = arith.mulf %242, %246 : vector<4x32xf32>
    %248 = tpu.concatenate %247, %225 in 1 : vector<4x32xf32>, vector<4x32xf32> -> vector<4x64xf32>
    %249 = tpu.concatenate %248, %248, %248, %248 in 1 : vector<4x64xf32>, vector<4x64xf32>, vector<4x64xf32>, vector<4x64xf32> -> vector<4x256xf32>
    %250 = arith.mulf %249, %7 : vector<4x256xf32>
    %cst_40 = arith.constant dense<0.000000e+00> : vector<4x128xf32>
    %251 = tpu.matmul %250, %4, %cst_40 {dimension_numbers = #tpu.dot_dimension_numbers<[1], [0], [0], [1], [0, 0, 1, 1], [], []>} : vector<4x256xf32>, vector<256x128xf32>, vector<4x128xf32> -> vector<4x128xf32>
    %252 = arith.addf %5, %251 : vector<4x128xf32>
    %253 = vector.extract_strided_slice %252 {offsets = [0, 0], sizes = [4, 96], strides = [1, 1]} : vector<4x128xf32> to vector<4x96xf32>
    %254 = arith.negf %253 : vector<4x96xf32>
    %255 = math.exp %254 : vector<4x96xf32>
    %cst_41 = arith.constant 1.000000e+00 : f32
    %256 = vector.broadcast %cst_41 : f32 to vector<4x96xf32>
    %257 = arith.addf %256, %255 : vector<4x96xf32>
    %258 = arith.divf %256, %257 : vector<4x96xf32>
    %259 = vector.extract_strided_slice %252 {offsets = [0, 96], sizes = [4, 32], strides = [1, 1]} : vector<4x128xf32> to vector<4x32xf32>
    %260 = math.tanh %259 : vector<4x32xf32>
    %261 = vector.extract_strided_slice %258 {offsets = [0, 0], sizes = [4, 32], strides = [1, 1]} : vector<4x96xf32> to vector<4x32xf32>
    %262 = vector.extract_strided_slice %258 {offsets = [0, 32], sizes = [4, 32], strides = [1, 1]} : vector<4x96xf32> to vector<4x32xf32>
    %263 = vector.extract_strided_slice %258 {offsets = [0, 64], sizes = [4, 32], strides = [1, 1]} : vector<4x96xf32> to vector<4x32xf32>
    %264 = arith.mulf %262, %223 : vector<4x32xf32>
    %265 = arith.mulf %261, %260 : vector<4x32xf32>
    %266 = arith.addf %264, %265 : vector<4x32xf32>
    %267 = math.tanh %266 : vector<4x32xf32>
    %268 = arith.mulf %263, %267 : vector<4x32xf32>
    %269 = tpu.concatenate %247, %247, %247, %247 in 1 : vector<4x32xf32>, vector<4x32xf32>, vector<4x32xf32>, vector<4x32xf32> -> vector<4x128xf32>
    %270 = arith.mulf %269, %6 : vector<4x128xf32>
    %271 = vector.extract_strided_slice %9 {offsets = [24, 0], sizes = [4, 128], strides = [1, 1]} : vector<32x128xf32> to vector<4x128xf32>
    %272 = arith.addf %271, %3 : vector<4x128xf32>
    %cst_42 = arith.constant dense<0.000000e+00> : vector<4x128xf32>
    %273 = tpu.matmul %270, %2, %cst_42 {dimension_numbers = #tpu.dot_dimension_numbers<[1], [0], [0], [1], [0, 0, 1, 1], [], []>} : vector<4x128xf32>, vector<128x128xf32>, vector<4x128xf32> -> vector<4x128xf32>
    %274 = arith.addf %272, %273 : vector<4x128xf32>
    %275 = vector.extract_strided_slice %274 {offsets = [0, 0], sizes = [4, 96], strides = [1, 1]} : vector<4x128xf32> to vector<4x96xf32>
    %276 = arith.negf %275 : vector<4x96xf32>
    %277 = math.exp %276 : vector<4x96xf32>
    %cst_43 = arith.constant 1.000000e+00 : f32
    %278 = vector.broadcast %cst_43 : f32 to vector<4x96xf32>
    %279 = arith.addf %278, %277 : vector<4x96xf32>
    %280 = arith.divf %278, %279 : vector<4x96xf32>
    %281 = vector.extract_strided_slice %274 {offsets = [0, 96], sizes = [4, 32], strides = [1, 1]} : vector<4x128xf32> to vector<4x32xf32>
    %282 = math.tanh %281 : vector<4x32xf32>
    %283 = vector.extract_strided_slice %280 {offsets = [0, 0], sizes = [4, 32], strides = [1, 1]} : vector<4x96xf32> to vector<4x32xf32>
    %284 = vector.extract_strided_slice %280 {offsets = [0, 32], sizes = [4, 32], strides = [1, 1]} : vector<4x96xf32> to vector<4x32xf32>
    %285 = vector.extract_strided_slice %280 {offsets = [0, 64], sizes = [4, 32], strides = [1, 1]} : vector<4x96xf32> to vector<4x32xf32>
    %286 = arith.mulf %284, %245 : vector<4x32xf32>
    %287 = arith.mulf %283, %282 : vector<4x32xf32>
    %288 = arith.addf %286, %287 : vector<4x32xf32>
    %289 = math.tanh %288 : vector<4x32xf32>
    %290 = arith.mulf %285, %289 : vector<4x32xf32>
    %291 = tpu.concatenate %290, %268 in 1 : vector<4x32xf32>, vector<4x32xf32> -> vector<4x64xf32>
    %292 = tpu.concatenate %291, %291, %291, %291 in 1 : vector<4x64xf32>, vector<4x64xf32>, vector<4x64xf32>, vector<4x64xf32> -> vector<4x256xf32>
    %293 = arith.mulf %292, %7 : vector<4x256xf32>
    %cst_44 = arith.constant dense<0.000000e+00> : vector<4x128xf32>
    %294 = tpu.matmul %293, %4, %cst_44 {dimension_numbers = #tpu.dot_dimension_numbers<[1], [0], [0], [1], [0, 0, 1, 1], [], []>} : vector<4x256xf32>, vector<256x128xf32>, vector<4x128xf32> -> vector<4x128xf32>
    %295 = arith.addf %5, %294 : vector<4x128xf32>
    %296 = vector.extract_strided_slice %295 {offsets = [0, 0], sizes = [4, 96], strides = [1, 1]} : vector<4x128xf32> to vector<4x96xf32>
    %297 = arith.negf %296 : vector<4x96xf32>
    %298 = math.exp %297 : vector<4x96xf32>
    %cst_45 = arith.constant 1.000000e+00 : f32
    %299 = vector.broadcast %cst_45 : f32 to vector<4x96xf32>
    %300 = arith.addf %299, %298 : vector<4x96xf32>
    %301 = arith.divf %299, %300 : vector<4x96xf32>
    %302 = vector.extract_strided_slice %295 {offsets = [0, 96], sizes = [4, 32], strides = [1, 1]} : vector<4x128xf32> to vector<4x32xf32>
    %303 = math.tanh %302 : vector<4x32xf32>
    %304 = vector.extract_strided_slice %301 {offsets = [0, 0], sizes = [4, 32], strides = [1, 1]} : vector<4x96xf32> to vector<4x32xf32>
    %305 = vector.extract_strided_slice %301 {offsets = [0, 32], sizes = [4, 32], strides = [1, 1]} : vector<4x96xf32> to vector<4x32xf32>
    %306 = vector.extract_strided_slice %301 {offsets = [0, 64], sizes = [4, 32], strides = [1, 1]} : vector<4x96xf32> to vector<4x32xf32>
    %307 = arith.mulf %305, %266 : vector<4x32xf32>
    %308 = arith.mulf %304, %303 : vector<4x32xf32>
    %309 = arith.addf %307, %308 : vector<4x32xf32>
    %310 = math.tanh %309 : vector<4x32xf32>
    %311 = arith.mulf %306, %310 : vector<4x32xf32>
    %312 = tpu.concatenate %290, %290, %290, %290 in 1 : vector<4x32xf32>, vector<4x32xf32>, vector<4x32xf32>, vector<4x32xf32> -> vector<4x128xf32>
    %313 = arith.mulf %312, %6 : vector<4x128xf32>
    %314 = vector.extract_strided_slice %9 {offsets = [28, 0], sizes = [4, 128], strides = [1, 1]} : vector<32x128xf32> to vector<4x128xf32>
    %315 = arith.addf %314, %3 : vector<4x128xf32>
    %cst_46 = arith.constant dense<0.000000e+00> : vector<4x128xf32>
    %316 = tpu.matmul %313, %2, %cst_46 {dimension_numbers = #tpu.dot_dimension_numbers<[1], [0], [0], [1], [0, 0, 1, 1], [], []>} : vector<4x128xf32>, vector<128x128xf32>, vector<4x128xf32> -> vector<4x128xf32>
    %317 = arith.addf %315, %316 : vector<4x128xf32>
    %318 = vector.extract_strided_slice %317 {offsets = [0, 0], sizes = [4, 96], strides = [1, 1]} : vector<4x128xf32> to vector<4x96xf32>
    %319 = arith.negf %318 : vector<4x96xf32>
    %320 = math.exp %319 : vector<4x96xf32>
    %cst_47 = arith.constant 1.000000e+00 : f32
    %321 = vector.broadcast %cst_47 : f32 to vector<4x96xf32>
    %322 = arith.addf %321, %320 : vector<4x96xf32>
    %323 = arith.divf %321, %322 : vector<4x96xf32>
    %324 = vector.extract_strided_slice %317 {offsets = [0, 96], sizes = [4, 32], strides = [1, 1]} : vector<4x128xf32> to vector<4x32xf32>
    %325 = math.tanh %324 : vector<4x32xf32>
    %326 = vector.extract_strided_slice %323 {offsets = [0, 0], sizes = [4, 32], strides = [1, 1]} : vector<4x96xf32> to vector<4x32xf32>
    %327 = vector.extract_strided_slice %323 {offsets = [0, 32], sizes = [4, 32], strides = [1, 1]} : vector<4x96xf32> to vector<4x32xf32>
    %328 = vector.extract_strided_slice %323 {offsets = [0, 64], sizes = [4, 32], strides = [1, 1]} : vector<4x96xf32> to vector<4x32xf32>
    %329 = arith.mulf %327, %288 : vector<4x32xf32>
    %330 = arith.mulf %326, %325 : vector<4x32xf32>
    %331 = arith.addf %329, %330 : vector<4x32xf32>
    %332 = math.tanh %331 : vector<4x32xf32>
    %333 = arith.mulf %328, %332 : vector<4x32xf32>
    %334 = tpu.concatenate %333, %311 in 1 : vector<4x32xf32>, vector<4x32xf32> -> vector<4x64xf32>
    %335 = tpu.concatenate %334, %334, %334, %334 in 1 : vector<4x64xf32>, vector<4x64xf32>, vector<4x64xf32>, vector<4x64xf32> -> vector<4x256xf32>
    %336 = arith.mulf %335, %7 : vector<4x256xf32>
    %cst_48 = arith.constant dense<0.000000e+00> : vector<4x128xf32>
    %337 = tpu.matmul %336, %4, %cst_48 {dimension_numbers = #tpu.dot_dimension_numbers<[1], [0], [0], [1], [0, 0, 1, 1], [], []>} : vector<4x256xf32>, vector<256x128xf32>, vector<4x128xf32> -> vector<4x128xf32>
    %338 = arith.addf %5, %337 : vector<4x128xf32>
    %339 = vector.extract_strided_slice %338 {offsets = [0, 0], sizes = [4, 96], strides = [1, 1]} : vector<4x128xf32> to vector<4x96xf32>
    %340 = arith.negf %339 : vector<4x96xf32>
    %341 = math.exp %340 : vector<4x96xf32>
    %cst_49 = arith.constant 1.000000e+00 : f32
    %342 = vector.broadcast %cst_49 : f32 to vector<4x96xf32>
    %343 = arith.addf %342, %341 : vector<4x96xf32>
    %344 = arith.divf %342, %343 : vector<4x96xf32>
    %345 = vector.extract_strided_slice %338 {offsets = [0, 96], sizes = [4, 32], strides = [1, 1]} : vector<4x128xf32> to vector<4x32xf32>
    %346 = math.tanh %345 : vector<4x32xf32>
    %347 = vector.extract_strided_slice %344 {offsets = [0, 0], sizes = [4, 32], strides = [1, 1]} : vector<4x96xf32> to vector<4x32xf32>
    %348 = vector.extract_strided_slice %344 {offsets = [0, 32], sizes = [4, 32], strides = [1, 1]} : vector<4x96xf32> to vector<4x32xf32>
    %349 = vector.extract_strided_slice %344 {offsets = [0, 64], sizes = [4, 32], strides = [1, 1]} : vector<4x96xf32> to vector<4x32xf32>
    %350 = arith.mulf %348, %309 : vector<4x32xf32>
    %351 = arith.mulf %347, %346 : vector<4x32xf32>
    %352 = arith.addf %350, %351 : vector<4x32xf32>
    %353 = math.tanh %352 : vector<4x32xf32>
    %354 = arith.mulf %349, %353 : vector<4x32xf32>
    %355 = vector.broadcast %8 : vector<1x32xf32> to vector<4x32xf32>
    %356 = arith.mulf %354, %355 : vector<4x32xf32>
    %cst_50 = arith.constant dense<0.000000e+00> : vector<4xf32>
    %357 = vector.multi_reduction <add>, %356, %cst_50 [1] : vector<4x32xf32> to vector<4xf32>
    %358 = vector.shape_cast %357 : vector<4xf32> to vector<4x1xf32>
    %359 = arith.mulf %354, %354 : vector<4x32xf32>
    %cst_51 = arith.constant dense<0.000000e+00> : vector<4xf32>
    %360 = vector.multi_reduction <add>, %359, %cst_51 [1] : vector<4x32xf32> to vector<4xf32>
    %361 = vector.shape_cast %360 : vector<4xf32> to vector<4x1xf32>
    %362 = arith.mulf %8, %8 : vector<1x32xf32>
    %cst_52 = arith.constant dense<0.000000e+00> : vector<1xf32>
    %363 = vector.multi_reduction <add>, %362, %cst_52 [1] : vector<1x32xf32> to vector<1xf32>
    %364 = vector.shape_cast %363 : vector<1xf32> to vector<1x1xf32>
    %365 = vector.broadcast %364 : vector<1x1xf32> to vector<4x1xf32>
    %366 = arith.mulf %361, %365 : vector<4x1xf32>
    %cst_53 = arith.constant 1.000000e-16 : f32
    %367 = vector.broadcast %cst_53 : f32 to vector<4x1xf32>
    %368 = arith.maximumf %366, %367 : vector<4x1xf32>
    %369 = math.rsqrt %368 : vector<4x1xf32>
    %370 = arith.mulf %358, %369 : vector<4x1xf32>
    %cst_54 = arith.constant dense<0xFF800000> : vector<1xf32>
    %371 = vector.multi_reduction <maximumf>, %370, %cst_54 [0] : vector<4x1xf32> to vector<1xf32>
    %372 = vector.shape_cast %371 : vector<1xf32> to vector<1x1xf32>
    %373 = vector.broadcast %372 : vector<1x1xf32> to vector<4x1xf32>
    %374 = arith.subf %370, %373 : vector<4x1xf32>
    %375 = math.exp %374 : vector<4x1xf32>
    %cst_55 = arith.constant dense<0.000000e+00> : vector<1xf32>
    %376 = vector.multi_reduction <add>, %375, %cst_55 [0] : vector<4x1xf32> to vector<1xf32>
    %377 = vector.shape_cast %376 : vector<1xf32> to vector<1x1xf32>
    %378 = tpu.reciprocal %377 {approx = true} : vector<1x1xf32> -> vector<1x1xf32>
    %379 = arith.mulf %377, %378 : vector<1x1xf32>
    %cst_56 = arith.constant 2.000000e+00 : f32
    %380 = vector.broadcast %cst_56 : f32 to vector<1x1xf32>
    %381 = arith.subf %380, %379 : vector<1x1xf32>
    %382 = arith.mulf %378, %381 : vector<1x1xf32>
    %383 = vector.broadcast %382 : vector<1x1xf32> to vector<4x1xf32>
    %384 = arith.mulf %375, %383 : vector<4x1xf32>
    %385 = vector.broadcast %384 : vector<4x1xf32> to vector<4x32xf32>
    %386 = arith.mulf %385, %354 : vector<4x32xf32>
    %cst_57 = arith.constant dense<0.000000e+00> : vector<32xf32>
    %387 = vector.multi_reduction <add>, %386, %cst_57 [0] : vector<4x32xf32> to vector<32xf32>
    %388 = vector.shape_cast %387 : vector<32xf32> to vector<1x32xf32>
    %c0_58 = arith.constant 0 : index
    %c0_59 = arith.constant 0 : index
    %389 = vector.load %arg9[%c0_58, %c0_59] : memref<1x32xf32, #tpu.memory_space<vmem>>, vector<1x32xf32>
    tpu.vector_store %arg9[%c0_58, %c0_59], %388 {strides = array<i32>} : memref<1x32xf32, #tpu.memory_space<vmem>>, vector<1x32xf32>,
    return
  }
}

</mosaic_0001>

<llo_original>
// kernel: tpu_custom_call.1
$region0: #{tpu_custom_call.1}
  #allocation0 [shape = 'u32[]', space=smem, size = 0x4, offset = 0x4, fixed_abs, tag = 'smem constant byte address 0x4 - core index']
  #allocation1 [shape = 'u32[144,128]{1,0:T(1,128)}', space=vmem, size = 0x12000, scoped, tag = 'internal scratch']
  %s0 = inlined_call_operand.vmem [shape: f32[32,16], index: 0, kind: input, shape index: {}]
  %s1 = inlined_call_operand.vmem [shape: f32[16,128], index: 1, kind: input, shape index: {}]
  %s2 = inlined_call_operand.hbm [shape: f32[128,128], index: 2, kind: input, shape index: {}]
  %s3 = inlined_call_operand.vmem [shape: f32[4,128], index: 3, kind: input, shape index: {}]
  %s4 = inlined_call_operand.hbm [shape: f32[256,128], index: 4, kind: input, shape index: {}]
  %s5 = inlined_call_operand.vmem [shape: f32[4,128], index: 5, kind: input, shape index: {}]
  %s6 = inlined_call_operand.vmem [shape: f32[4,128], index: 6, kind: input, shape index: {}]
  %s7 = inlined_call_operand.vmem [shape: f32[4,256], index: 7, kind: input, shape index: {}]
  %s8 = inlined_call_operand.vmem [shape: f32[1,32], index: 8, kind: input, shape index: {}]
  %s9 = inlined_call_operand.hbm [shape: f32[1,32], index: 9, kind: output, shape index: {}]
  %s10 = sld [smem:[#allocation0]]
  $region54: #{tpu_custom_call.1} parent=0
    _
  %s12 = ssub.s32 1, %s10
  %s13 = scalar_select 0, %s12, %s10
  $region1: #{tpu_custom_call.1} parent=0
    #allocation2 [shape = 'u8[65536]{0}', space=vmem, size = 0x10000, scoped, tag = 'input window, operand 2, single buffered']
    #allocation3 [shape = 's32[1]{0}', space=sflag, size = 0x4, scoped, tag = 'scoped memory for tpu_custom_call.1']
    #allocation4 [shape = 's32[1]{0}', space=sflag, size = 0x4, scoped, tag = 'scoped memory for tpu_custom_call.1']
    #allocation5 [shape = 'u8[131072]{0}', space=vmem, size = 0x20000, scoped, tag = 'input window, operand 4, single buffered']
    #allocation6 [shape = 's32[1]{0}', space=sflag, size = 0x4, scoped, tag = 'scoped memory for tpu_custom_call.1']
    #allocation7 [shape = 'u8[512]{0}', space=vmem, size = 0x400, scoped, tag = 'output window, operand 0, single buffered']
    %14 = vsyncpa [#allocation3], 0
    %15 = vsyncpa [#allocation6], 0
    %16 = vsyncpa [#allocation4], 0
    // Predicated region
    $region2: #{tpu_custom_call.1} parent=1 // pred_check
      _
    $region3: #{tpu_custom_call.1} parent=1 // pred_check_branch
      %18 = sbr.rel (0) target = $region5
    $region4: #{tpu_custom_call.1} parent=1 // pred_region
      _
    $region5: #{tpu_custom_call.1} parent=1 // pred_fallthru
      _
    // Predicated region
    $region6: #{tpu_custom_call.1} parent=1 // pred_check
      _
    $region7: #{tpu_custom_call.1} parent=1 // pred_check_branch
      %20 = sbr.rel (0) target = $region9
    $region8: #{tpu_custom_call.1} parent=1 // pred_region
      _
    $region9: #{tpu_custom_call.1} parent=1 // pred_fallthru
      _
    // Predicated region
    $region10: #{tpu_custom_call.1} parent=1 // pred_check
      _
    $region11: #{tpu_custom_call.1} parent=1 // pred_check_branch
      %22 = sbr.rel (0) target = $region13
    $region12: #{tpu_custom_call.1} parent=1 // pred_region
      %s24 = ssub.s32 2048, 2048
      %25 = vsyncadd [#allocation3], %s24
      %s26 = sshll.u32 [#allocation2], 4
      %s27 = int_to_ptr.vmem [resolvable:$true] %s26
      %32 = dma.hbm_to_vmem [thread:$0]  %s2, 2048, %s27, [#allocation3], 128, 128, 8
    $region13: #{tpu_custom_call.1} parent=1 // pred_fallthru
      _
    // Predicated region
    $region14: #{tpu_custom_call.1} parent=1 // pred_check
      _
    $region15: #{tpu_custom_call.1} parent=1 // pred_check_branch
      %34 = sbr.rel (0) target = $region17
    $region16: #{tpu_custom_call.1} parent=1 // pred_region
      _
    $region17: #{tpu_custom_call.1} parent=1 // pred_fallthru
      _
    // Predicated region
    $region18: #{tpu_custom_call.1} parent=1 // pred_check
      _
    $region19: #{tpu_custom_call.1} parent=1 // pred_check_branch
      %36 = sbr.rel (0) target = $region21
    $region20: #{tpu_custom_call.1} parent=1 // pred_region
      %s38 = ssub.s32 4096, 4096
      %39 = vsyncadd [#allocation6], %s38
      %s40 = sshll.u32 [#allocation5], 4
      %s41 = int_to_ptr.vmem [resolvable:$true] %s40
      %46 = dma.hbm_to_vmem [thread:$0]  %s4, 4096, %s41, [#allocation6], 128, 128, 8
    $region21: #{tpu_custom_call.1} parent=1 // pred_fallthru
      _
    // Predicated region
    $region22: #{tpu_custom_call.1} parent=1 // pred_check
      _
    $region23: #{tpu_custom_call.1} parent=1 // pred_check_branch
      %48 = sbr.rel (0) target = $region25
    $region24: #{tpu_custom_call.1} parent=1 // pred_region
      _
    $region25: #{tpu_custom_call.1} parent=1 // pred_fallthru
      _
    // Predicated region
    $region26: #{tpu_custom_call.1} parent=1 // pred_check
      _
    $region27: #{tpu_custom_call.1} parent=1 // pred_check_branch
      %50 = sbr.rel (0) target = $region29
    $region28: #{tpu_custom_call.1} parent=1 // pred_region
      _
    $region29: #{tpu_custom_call.1} parent=1 // pred_fallthru
      _
    // Predicated region
    $region30: #{tpu_custom_call.1} parent=1 // pred_check
      _
    $region31: #{tpu_custom_call.1} parent=1 // pred_check_branch
      %52 = sbr.rel (0) target = $region33
    $region32: #{tpu_custom_call.1} parent=1 // pred_region
      _
    $region33: #{tpu_custom_call.1} parent=1 // pred_fallthru
      _
    // Predicated region
    $region34: #{tpu_custom_call.1} parent=1 // pred_check
      _
    $region35: #{tpu_custom_call.1} parent=1 // pred_check_branch
      %54 = sbr.rel (0) target = $region37
    $region36: #{tpu_custom_call.1} parent=1 // pred_region
      _
    $region37: #{tpu_custom_call.1} parent=1 // pred_fallthru
      _
    // Predicated region
    $region38: #{tpu_custom_call.1} parent=1 // pred_check
      _
    $region39: #{tpu_custom_call.1} parent=1 // pred_check_branch
      %56 = sbr.rel (0) target = $region41
    $region40: #{tpu_custom_call.1} parent=1 // pred_region
      %57 = dma.done [#allocation3], 2048
    $region41: #{tpu_custom_call.1} parent=1 // pred_fallthru
      _
    // Predicated region
    $region42: #{tpu_custom_call.1} parent=1 // pred_check
      _
    $region43: #{tpu_custom_call.1} parent=1 // pred_check_branch
      %59 = sbr.rel (0) target = $region45
    $region44: #{tpu_custom_call.1} parent=1 // pred_region
      %60 = dma.done [#allocation6], 4096
    $region45: #{tpu_custom_call.1} parent=1 // pred_fallthru
      _
    %v61 = vld [vmem:[%s0] sm:$0xff]
    %v62 = vld [vmem:[%s0 + $0x8] sm:$0xff]
    %v63 = vld [vmem:[%s0 + $0x10] sm:$0xff]
    %v64 = vld [vmem:[%s0 + $0x18] sm:$0xff]
    %v65 = vld [vmem:[%s1] sm:$0xff]
    %v66 = vld [vmem:[%s1 + $0x8] sm:$0xff]
    %v67 = vld [vmem:[#allocation2] sm:$0xff]
    %v68 = vld [vmem:[#allocation2 + $0x8] sm:$0xff]
    %v69 = vld [vmem:[#allocation2 + $0x10] sm:$0xff]
    %v70 = vld [vmem:[#allocation2 + $0x18] sm:$0xff]
    %v71 = vld [vmem:[#allocation2 + $0x20] sm:$0xff]
    %v72 = vld [vmem:[#allocation2 + $0x28] sm:$0xff]
    %v73 = vld [vmem:[#allocation2 + $0x30] sm:$0xff]
    %v74 = vld [vmem:[#allocation2 + $0x38] sm:$0xff]
    %v75 = vld [vmem:[#allocation2 + $0x40] sm:$0xff]
    %v76 = vld [vmem:[#allocation2 + $0x48] sm:$0xff]
    %v77 = vld [vmem:[#allocation2 + $0x50] sm:$0xff]
    %v78 = vld [vmem:[#allocation2 + $0x58] sm:$0xff]
    %v79 = vld [vmem:[#allocation2 + $0x60] sm:$0xff]
    %v80 = vld [vmem:[#allocation2 + $0x68] sm:$0xff]
    %v81 = vld [vmem:[#allocation2 + $0x70] sm:$0xff]
    %v82 = vld [vmem:[#allocation2 + $0x78] sm:$0xff]
    %v83 = vld [vmem:[%s3] sm:$0xf]
    %v84 = vld [vmem:[#allocation5] sm:$0xff]
    %v85 = vld [vmem:[#allocation5 + $0x8] sm:$0xff]
    %v86 = vld [vmem:[#allocation5 + $0x10] sm:$0xff]
    %v87 = vld [vmem:[#allocation5 + $0x18] sm:$0xff]
    %v88 = vld [vmem:[#allocation5 + $0x20] sm:$0xff]
    %v89 = vld [vmem:[#allocation5 + $0x28] sm:$0xff]
    %v90 = vld [vmem:[#allocation5 + $0x30] sm:$0xff]
    %v91 = vld [vmem:[#allocation5 + $0x38] sm:$0xff]
    %v92 = vld [vmem:[#allocation5 + $0x40] sm:$0xff]
    %v93 = vld [vmem:[#allocation5 + $0x48] sm:$0xff]
    %v94 = vld [vmem:[#allocation5 + $0x50] sm:$0xff]
    %v95 = vld [vmem:[#allocation5 + $0x58] sm:$0xff]
    %v96 = vld [vmem:[#allocation5 + $0x60] sm:$0xff]
    %v97 = vld [vmem:[#allocation5 + $0x68] sm:$0xff]
    %v98 = vld [vmem:[#allocation5 + $0x70] sm:$0xff]
    %v99 = vld [vmem:[#allocation5 + $0x78] sm:$0xff]
    %v100 = vld [vmem:[#allocation5 + $0x80] sm:$0xff]
    %v101 = vld [vmem:[#allocation5 + $0x88] sm:$0xff]
    %v102 = vld [vmem:[#allocation5 + $0x90] sm:$0xff]
    %v103 = vld [vmem:[#allocation5 + $0x98] sm:$0xff]
    %v104 = vld [vmem:[#allocation5 + $0xa0] sm:$0xff]
    %v105 = vld [vmem:[#allocation5 + $0xa8] sm:$0xff]
    %v106 = vld [vmem:[#allocation5 + $0xb0] sm:$0xff]
    %v107 = vld [vmem:[#allocation5 + $0xb8] sm:$0xff]
    %v108 = vld [vmem:[#allocation5 + $0xc0] sm:$0xff]
    %v109 = vld [vmem:[#allocation5 + $0xc8] sm:$0xff]
    %v110 = vld [vmem:[#allocation5 + $0xd0] sm:$0xff]
    %v111 = vld [vmem:[#allocation5 + $0xd8] sm:$0xff]
    %v112 = vld [vmem:[#allocation5 + $0xe0] sm:$0xff]
    %v113 = vld [vmem:[#allocation5 + $0xe8] sm:$0xff]
    %v114 = vld [vmem:[#allocation5 + $0xf0] sm:$0xff]
    %v115 = vld [vmem:[#allocation5 + $0xf8] sm:$0xff]
    %v116 = vld [vmem:[%s5] sm:$0xf]
    %v117 = vld [vmem:[%s6] sm:$0xf]
    %v118 = vld [vmem:[%s7] sm:$0xff]
    %v119 = vld [vmem:[%s8] sm:$0x1]
    %vm120 = vcmask 130048
    %v122 = vsel %vm120, %v61, 0
    %v125 = vsel %vm120, %v62, 0
    %v128 = vsel %vm120, %v63, 0
    %v131 = vsel %vm120, %v64, 0
    %133 = vmatprep.subr.mxu0 0.0
    %134 = vmatpush1.msra.mxu0 %v65
    %135 = vmatprep.subr.mxu0 0.0
    %136 = vmatpush1.msra.mxu0 %v66
    %137 = vmatprep.subr.mxu0 0.0
    %138 = vmatpush1.msra.mxu0 0.0
    %139 = vmatprep.subr.mxu0 0.0
    %140 = vmatpush1.msra.mxu0 0.0
    %141 = vmatprep.subr.mxu0 0.0
    %142 = vmatpush1.msra.mxu0 0.0
    %143 = vmatprep.subr.mxu0 0.0
    %144 = vmatpush1.msra.mxu0 0.0
    %145 = vmatprep.subr.mxu0 0.0
    %146 = vmatpush1.msra.mxu0 0.0
    %147 = vmatprep.subr.mxu0 0.0
    %148 = vmatpush1.msra.mxu0 0.0
    %149 = vmatprep.subr.mxu0 0.0
    %150 = vmatpush1.msra.mxu0 0.0
    %151 = vmatprep.subr.mxu0 0.0
    %152 = vmatpush1.msra.mxu0 0.0
    %153 = vmatprep.subr.mxu0 0.0
    %154 = vmatpush1.msra.mxu0 0.0
    %155 = vmatprep.subr.mxu0 0.0
    %156 = vmatpush1.msra.mxu0 0.0
    %157 = vmatprep.subr.mxu0 0.0
    %158 = vmatpush1.msra.mxu0 0.0
    %159 = vmatprep.subr.mxu0 0.0
    %160 = vmatpush1.msra.mxu0 0.0
    %161 = vmatprep.subr.mxu0 0.0
    %162 = vmatpush1.msra.mxu0 0.0
    %163 = vmatprep.subr.mxu0 0.0
    %164 = vmatpush1.msra.mxu0 0.0
    %165 = vmatprep.subr.mxu0 0.0
    %166 = vmatpush1.msra.mxu0 0.0
    %167 = vmatprep.subr.mxu0 0.0
    %168 = vmatpush1.msra.mxu0 0.0
    %169 = vmatprep.subr.mxu0 0.0
    %170 = vmatpush1.msra.mxu0 0.0
    %171 = vmatprep.subr.mxu0 0.0
    %172 = vmatpush1.msra.mxu0 0.0
    %173 = vmatprep.subr.mxu0 0.0
    %174 = vmatpush1.msra.mxu0 0.0
    %175 = vmatprep.subr.mxu0 0.0
    %176 = vmatpush1.msra.mxu0 0.0
    %177 = vmatprep.subr.mxu0 0.0
    %178 = vmatpush1.msra.mxu0 0.0
    %179 = vmatprep.subr.mxu0 0.0
    %180 = vmatpush1.msra.mxu0 0.0
    %181 = vmatprep.subr.mxu0 0.0
    %182 = vmatpush1.msra.mxu0 0.0
    %183 = vmatprep.subr.mxu0 0.0
    %184 = vmatpush1.msra.mxu0 0.0
    %185 = vmatprep.subr.mxu0 0.0
    %186 = vmatpush1.msra.mxu0 0.0
    %187 = vmatprep.subr.mxu0 0.0
    %188 = vmatpush1.msra.mxu0 0.0
    %189 = vmatprep.subr.mxu0 0.0
    %190 = vmatpush1.msra.mxu0 0.0
    %191 = vmatprep.subr.mxu0 0.0
    %192 = vmatpush1.msra.mxu0 0.0
    %193 = vmatprep.subr.mxu0 0.0
    %194 = vmatpush1.msra.mxu0 0.0
    %195 = vmatprep.subr.mxu0 0.0
    %196 = vmatpush1.msra.mxu0 0.0
    %197 = vmatprep.mubr.f32.mxu0 0.0
    %198 = vmatmul.mubr.f32.gmra.mrb[0].mxu0 %v122
    %v199 = vpop.f32.mrb[0].mxu0
    %v200 = vadd.f32 0.0, %v199
    %v201 = vpop.f32.mrb[0].mxu0
    %202 = vmatprep.mubr.f32.mxu0 0.0
    %203 = vmatmul.mubr.f32.gmra.mrb[0].mxu0 %v125
    %v204 = vpop.f32.mrb[0].mxu0
    %v205 = vadd.f32 0.0, %v204
    %v206 = vpop.f32.mrb[0].mxu0
    %207 = vmatprep.mubr.f32.mxu0 0.0
    %208 = vmatmul.mubr.f32.gmra.mrb[0].mxu0 %v128
    %v209 = vpop.f32.mrb[0].mxu0
    %v210 = vadd.f32 0.0, %v209
    %v211 = vpop.f32.mrb[0].mxu0
    %212 = vmatprep.mubr.f32.mxu0 0.0
    %213 = vmatmul.mubr.f32.gmra.mrb[0].mxu0 %v131
    %v214 = vpop.f32.mrb[0].mxu0
    %v215 = vadd.f32 0.0, %v214
    %v216 = vpop.f32.mrb[0].mxu0
    %217 = vdwg.mxu0
    %v218 = vmul.f32 %v117, 0.0
    %v219 = vadd.f32 %v200, %v83
    %220 = vmatprep.subr.mxu0 0.0
    %221 = vmatpush1.msra.mxu0 %v67
    %222 = vmatprep.subr.mxu0 0.0
    %223 = vmatpush1.msra.mxu0 %v68
    %224 = vmatprep.subr.mxu0 0.0
    %225 = vmatpush1.msra.mxu0 %v69
    %226 = vmatprep.subr.mxu0 0.0
    %227 = vmatpush1.msra.mxu0 %v70
    %228 = vmatprep.subr.mxu0 0.0
    %229 = vmatpush1.msra.mxu0 %v71
    %230 = vmatprep.subr.mxu0 0.0
    %231 = vmatpush1.msra.mxu0 %v72
    %232 = vmatprep.subr.mxu0 0.0
    %233 = vmatpush1.msra.mxu0 %v73
    %234 = vmatprep.subr.mxu0 0.0
    %235 = vmatpush1.msra.mxu0 %v74
    %236 = vmatprep.subr.mxu0 0.0
    %237 = vmatpush1.msra.mxu0 %v75
    %238 = vmatprep.subr.mxu0 0.0
    %239 = vmatpush1.msra.mxu0 %v76
    %240 = vmatprep.subr.mxu0 0.0
    %241 = vmatpush1.msra.mxu0 %v77
    %242 = vmatprep.subr.mxu0 0.0
    %243 = vmatpush1.msra.mxu0 %v78
    %244 = vmatprep.subr.mxu0 0.0
    %245 = vmatpush1.msra.mxu0 %v79
    %246 = vmatprep.subr.mxu0 0.0
    %247 = vmatpush1.msra.mxu0 %v80
    %248 = vmatprep.subr.mxu0 0.0
    %249 = vmatpush1.msra.mxu0 %v81
    %250 = vmatprep.subr.mxu0 0.0
    %251 = vmatpush1.msra.mxu0 %v82
    %252 = vmatprep.subr.mxu0 0.0
    %253 = vmatpush1.msra.mxu0 0.0
    %254 = vmatprep.subr.mxu0 0.0
    %255 = vmatpush1.msra.mxu0 0.0
    %256 = vmatprep.subr.mxu0 0.0
    %257 = vmatpush1.msra.mxu0 0.0
    %258 = vmatprep.subr.mxu0 0.0
    %259 = vmatpush1.msra.mxu0 0.0
    %260 = vmatprep.subr.mxu0 0.0
    %261 = vmatpush1.msra.mxu0 0.0
    %262 = vmatprep.subr.mxu0 0.0
    %263 = vmatpush1.msra.mxu0 0.0
    %264 = vmatprep.subr.mxu0 0.0
    %265 = vmatpush1.msra.mxu0 0.0
    %266 = vmatprep.subr.mxu0 0.0
    %267 = vmatpush1.msra.mxu0 0.0
    %268 = vmatprep.subr.mxu0 0.0
    %269 = vmatpush1.msra.mxu0 0.0
    %270 = vmatprep.subr.mxu0 0.0
    %271 = vmatpush1.msra.mxu0 0.0
    %272 = vmatprep.subr.mxu0 0.0
    %273 = vmatpush1.msra.mxu0 0.0
    %274 = vmatprep.subr.mxu0 0.0
    %275 = vmatpush1.msra.mxu0 0.0
    %276 = vmatprep.subr.mxu0 0.0
    %277 = vmatpush1.msra.mxu0 0.0
    %278 = vmatprep.subr.mxu0 0.0
    %279 = vmatpush1.msra.mxu0 0.0
    %280 = vmatprep.subr.mxu0 0.0
    %281 = vmatpush1.msra.mxu0 0.0
    %282 = vmatprep.subr.mxu0 0.0
    %283 = vmatpush1.msra.mxu0 0.0
    %284 = vmatprep.mubr.f32.mxu0 0.0
    %285 = vmatmul.mubr.f32.gmra.mrb[0].mxu0 %v218
    %v286 = vpop.f32.mrb[0].mxu0
    %v287 = vadd.f32 0.0, %v286
    %v288 = vpop.f32.mrb[0].mxu0
    %289 = vdwg.mxu0
    %v290 = vadd.f32 %v219, %v287
    %v291 = vxor.u32 %v290, 2147483648
    %v292 = vmul.f32 %v291, 1.442695
    %v293 = vpow.pop %v292
    %v294 = vadd.f32 %v293, 1.0
    %v295 = vrcp.pop %v294
    %v296 = vmul.f32 1.0, %v295
    %v297 = vtanh.pop %v290
    %v298 = vmul.f32 %v296, 0.0
    %300 = vrot.lane.b32.xlu0 %v297, 32
    %v301 = vpop.permute.xlu0 %300
    %v303 = vmul.f32 %v296, %v301
    %305 = vrot.lane.b32.xlu0 %v303, 32
    %v306 = vpop.permute.xlu0 %305
    %v308 = vadd.f32 %v298, %v306
    %v309 = vtanh.pop %v308
    %311 = vrot.lane.b32.xlu0 %v309, 32
    %v312 = vpop.permute.xlu0 %311
    %v314 = vmul.f32 %v296, %v312
    %316 = vrot.lane.b32.xlu0 %v314, 64
    %v317 = vpop.permute.xlu0 %316
    %vm319 = vcmask 261120
    %v320 = vsel %vm319, %v317, 0.0
    %322 = vrot.lane.b32.xlu0 %v320, 64
    %v323 = vpop.permute.xlu0 %322
    %vm325 = vcmask 523264
    %v326 = vsel %vm325, %v320, %v323
    %v328 = vcombine.high %v118, %v118
    %v330 = vmul.f32 %v326, %v118
    %v331 = vmul.f32 %v326, %v328
    %332 = vmatprep.subr.mxu0 0.0
    %333 = vmatpush1.msra.mxu0 %v84
    %334 = vmatprep.subr.mxu0 0.0
    %335 = vmatpush1.msra.mxu0 %v85
    %336 = vmatprep.subr.mxu0 0.0
    %337 = vmatpush1.msra.mxu0 %v86
    %338 = vmatprep.subr.mxu0 0.0
    %339 = vmatpush1.msra.mxu0 %v87
    %340 = vmatprep.subr.mxu0 0.0
    %341 = vmatpush1.msra.mxu0 %v88
    %342 = vmatprep.subr.mxu0 0.0
    %343 = vmatpush1.msra.mxu0 %v89
    %344 = vmatprep.subr.mxu0 0.0
    %345 = vmatpush1.msra.mxu0 %v90
    %346 = vmatprep.subr.mxu0 0.0
    %347 = vmatpush1.msra.mxu0 %v91
    %348 = vmatprep.subr.mxu0 0.0
    %349 = vmatpush1.msra.mxu0 %v92
    %350 = vmatprep.subr.mxu0 0.0
    %351 = vmatpush1.msra.mxu0 %v93
    %352 = vmatprep.subr.mxu0 0.0
    %353 = vmatpush1.msra.mxu0 %v94
    %354 = vmatprep.subr.mxu0 0.0
    %355 = vmatpush1.msra.mxu0 %v95
    %356 = vmatprep.subr.mxu0 0.0
    %357 = vmatpush1.msra.mxu0 %v96
    %358 = vmatprep.subr.mxu0 0.0
    %359 = vmatpush1.msra.mxu0 %v97
    %360 = vmatprep.subr.mxu0 0.0
    %361 = vmatpush1.msra.mxu0 %v98
    %362 = vmatprep.subr.mxu0 0.0
    %363 = vmatpush1.msra.mxu0 %v99
    %364 = vmatprep.subr.mxu0 0.0
    %365 = vmatpush1.msra.mxu0 %v100
    %366 = vmatprep.subr.mxu0 0.0
    %367 = vmatpush1.msra.mxu0 %v101
    %368 = vmatprep.subr.mxu0 0.0
    %369 = vmatpush1.msra.mxu0 %v102
    %370 = vmatprep.subr.mxu0 0.0
    %371 = vmatpush1.msra.mxu0 %v103
    %372 = vmatprep.subr.mxu0 0.0
    %373 = vmatpush1.msra.mxu0 %v104
    %374 = vmatprep.subr.mxu0 0.0
    %375 = vmatpush1.msra.mxu0 %v105
    %376 = vmatprep.subr.mxu0 0.0
    %377 = vmatpush1.msra.mxu0 %v106
    %378 = vmatprep.subr.mxu0 0.0
    %379 = vmatpush1.msra.mxu0 %v107
    %380 = vmatprep.subr.mxu0 0.0
    %381 = vmatpush1.msra.mxu0 %v108
    %382 = vmatprep.subr.mxu0 0.0
    %383 = vmatpush1.msra.mxu0 %v109
    %384 = vmatprep.subr.mxu0 0.0
    %385 = vmatpush1.msra.mxu0 %v110
    %386 = vmatprep.subr.mxu0 0.0
    %387 = vmatpush1.msra.mxu0 %v111
    %388 = vmatprep.subr.mxu0 0.0
    %389 = vmatpush1.msra.mxu0 %v112
    %390 = vmatprep.subr.mxu0 0.0
    %391 = vmatpush1.msra.mxu0 %v113
    %392 = vmatprep.subr.mxu0 0.0
    %393 = vmatpush1.msra.mxu0 %v114
    %394 = vmatprep.subr.mxu0 0.0
    %395 = vmatpush1.msra.mxu0 %v115
    %396 = vmatprep.mubr.f32.mxu0 %v331
    %397 = vmatmul.mubr.f32.gmra.mrb[0].mxu0 %v330
    %v398 = vpop.f32.mrb[0].mxu0
    %v399 = vadd.f32 0.0, %v398
    %v400 = vpop.f32.mrb[0].mxu0
    %401 = vdwg.mxu0
    %v402 = vadd.f32 %v116, %v399
    %v403 = vxor.u32 %v402, 2147483648
    %v404 = vmul.f32 %v403, 1.442695
    %v405 = vpow.pop %v404
    %v406 = vadd.f32 %v405, 1.0
    %v407 = vrcp.pop %v406
    %v408 = vmul.f32 1.0, %v407
    %v409 = vtanh.pop %v402
    %v410 = vmul.f32 %v408, 0.0
    %412 = vrot.lane.b32.xlu0 %v409, 32
    %v413 = vpop.permute.xlu0 %412
    %v415 = vmul.f32 %v408, %v413
    %417 = vrot.lane.b32.xlu0 %v415, 32
    %v418 = vpop.permute.xlu0 %417
    %v420 = vadd.f32 %v410, %v418
    %v421 = vtanh.pop %v420
    %423 = vrot.lane.b32.xlu0 %v421, 32
    %v424 = vpop.permute.xlu0 %423
    %v426 = vmul.f32 %v408, %v424
    %427 = vrot.lane.b32.xlu0 %v314, 96
    %v428 = vpop.permute.xlu0 %427
    %430 = vrot.lane.b32.xlu0 %v314, 32
    %v431 = vpop.permute.xlu0 %430
    %v433 = vsel %vm319, %v317, %v428
    %v434 = vsel %vm325, %v433, %v314
    %vm435 = vcmask 785408
    %v436 = vsel %vm435, %v434, %v431
    %v437 = vmul.f32 %v436, %v117
    %v439 = vrot.slane %v83, 4
    %v441 = vadd.f32 %v200, %v439
    %442 = vmatprep.subr.mxu0 0.0
    %443 = vmatpush1.msra.mxu0 %v67
    %444 = vmatprep.subr.mxu0 0.0
    %445 = vmatpush1.msra.mxu0 %v68
    %446 = vmatprep.subr.mxu0 0.0
    %447 = vmatpush1.msra.mxu0 %v69
    %448 = vmatprep.subr.mxu0 0.0
    %449 = vmatpush1.msra.mxu0 %v70
    %450 = vmatprep.subr.mxu0 0.0
    %451 = vmatpush1.msra.mxu0 %v71
    %452 = vmatprep.subr.mxu0 0.0
    %453 = vmatpush1.msra.mxu0 %v72
    %454 = vmatprep.subr.mxu0 0.0
    %455 = vmatpush1.msra.mxu0 %v73
    %456 = vmatprep.subr.mxu0 0.0
    %457 = vmatpush1.msra.mxu0 %v74
    %458 = vmatprep.subr.mxu0 0.0
    %459 = vmatpush1.msra.mxu0 %v75
    %460 = vmatprep.subr.mxu0 0.0
    %461 = vmatpush1.msra.mxu0 %v76
    %462 = vmatprep.subr.mxu0 0.0
    %463 = vmatpush1.msra.mxu0 %v77
    %464 = vmatprep.subr.mxu0 0.0
    %465 = vmatpush1.msra.mxu0 %v78
    %466 = vmatprep.subr.mxu0 0.0
    %467 = vmatpush1.msra.mxu0 %v79
    %468 = vmatprep.subr.mxu0 0.0
    %469 = vmatpush1.msra.mxu0 %v80
    %470 = vmatprep.subr.mxu0 0.0
    %471 = vmatpush1.msra.mxu0 %v81
    %472 = vmatprep.subr.mxu0 0.0
    %473 = vmatpush1.msra.mxu0 %v82
    %474 = vmatprep.subr.mxu0 0.0
    %475 = vmatpush1.msra.mxu0 0.0
    %476 = vmatprep.subr.mxu0 0.0
    %477 = vmatpush1.msra.mxu0 0.0
    %478 = vmatprep.subr.mxu0 0.0
    %479 = vmatpush1.msra.mxu0 0.0
    %480 = vmatprep.subr.mxu0 0.0
    %481 = vmatpush1.msra.mxu0 0.0
    %482 = vmatprep.subr.mxu0 0.0
    %483 = vmatpush1.msra.mxu0 0.0
    %484 = vmatprep.subr.mxu0 0.0
    %485 = vmatpush1.msra.mxu0 0.0
    %486 = vmatprep.subr.mxu0 0.0
    %487 = vmatpush1.msra.mxu0 0.0
    %488 = vmatprep.subr.mxu0 0.0
    %489 = vmatpush1.msra.mxu0 0.0
    %490 = vmatprep.subr.mxu0 0.0
    %491 = vmatpush1.msra.mxu0 0.0
    %492 = vmatprep.subr.mxu0 0.0
    %493 = vmatpush1.msra.mxu0 0.0
    %494 = vmatprep.subr.mxu0 0.0
    %495 = vmatpush1.msra.mxu0 0.0
    %496 = vmatprep.subr.mxu0 0.0
    %497 = vmatpush1.msra.mxu0 0.0
    %498 = vmatprep.subr.mxu0 0.0
    %499 = vmatpush1.msra.mxu0 0.0
    %500 = vmatprep.subr.mxu0 0.0
    %501 = vmatpush1.msra.mxu0 0.0
    %502 = vmatprep.subr.mxu0 0.0
    %503 = vmatpush1.msra.mxu0 0.0
    %504 = vmatprep.subr.mxu0 0.0
    %505 = vmatpush1.msra.mxu0 0.0
    %506 = vmatprep.mubr.f32.mxu0 0.0
    %507 = vmatmul.mubr.f32.gmra.mrb[0].mxu0 %v437
    %v508 = vpop.f32.mrb[0].mxu0
    %v509 = vadd.f32 0.0, %v508
    %v510 = vpop.f32.mrb[0].mxu0
    %511 = vdwg.mxu0
    %v513 = vrot.slane %v509, 4
    %v515 = vadd.f32 %v441, %v513
    %v516 = vxor.u32 %v515, 2147483648
    %v517 = vmul.f32 %v516, 1.442695
    %v518 = vpow.pop %v517
    %v519 = vadd.f32 %v518, 1.0
    %v520 = vrcp.pop %v519
    %v521 = vmul.f32 1.0, %v520
    %v522 = vtanh.pop %v515
    %v524 = vrot.slane %v308, 4
    %v526 = vmul.f32 %v521, %v524
    %528 = vrot.lane.b32.xlu0 %v522, 32
    %v529 = vpop.permute.xlu0 %528
    %v531 = vmul.f32 %v521, %v529
    %533 = vrot.lane.b32.xlu0 %v531, 32
    %v534 = vpop.permute.xlu0 %533
    %v536 = vadd.f32 %v526, %v534
    %v537 = vtanh.pop %v536
    %539 = vrot.lane.b32.xlu0 %v537, 32
    %v540 = vpop.permute.xlu0 %539
    %v542 = vmul.f32 %v521, %v540
    %544 = vrot.lane.b32.xlu0 %v542, 64
    %v545 = vpop.permute.xlu0 %544
    %v548 = vrot.slane %v426, 4
    %549 = vrot.lane.b32.xlu0 %v548, 96
    %v550 = vpop.permute.xlu0 %549
    %v552 = vsel %vm319, %v545, %v550
    %554 = vrot.lane.b32.xlu0 %v552, 64
    %v555 = vpop.permute.xlu0 %554
    %v557 = vsel %vm325, %v552, %v555
    %v558 = vcombine.low %v118, %v118
    %v560 = vmul.f32 %v557, %v558
    %v561 = vmul.f32 %v557, %v118
    %v564 = vrot.slane %v560, 4
    %v565 = vrot.slane %v561, 4
    %568 = vmatprep.subr.mxu0 0.0
    %569 = vmatpush1.msra.mxu0 %v84
    %570 = vmatprep.subr.mxu0 0.0
    %571 = vmatpush1.msra.mxu0 %v85
    %572 = vmatprep.subr.mxu0 0.0
    %573 = vmatpush1.msra.mxu0 %v86
    %574 = vmatprep.subr.mxu0 0.0
    %575 = vmatpush1.msra.mxu0 %v87
    %576 = vmatprep.subr.mxu0 0.0
    %577 = vmatpush1.msra.mxu0 %v88
    %578 = vmatprep.subr.mxu0 0.0
    %579 = vmatpush1.msra.mxu0 %v89
    %580 = vmatprep.subr.mxu0 0.0
    %581 = vmatpush1.msra.mxu0 %v90
    %582 = vmatprep.subr.mxu0 0.0
    %583 = vmatpush1.msra.mxu0 %v91
    %584 = vmatprep.subr.mxu0 0.0
    %585 = vmatpush1.msra.mxu0 %v92
    %586 = vmatprep.subr.mxu0 0.0
    %587 = vmatpush1.msra.mxu0 %v93
    %588 = vmatprep.subr.mxu0 0.0
    %589 = vmatpush1.msra.mxu0 %v94
    %590 = vmatprep.subr.mxu0 0.0
    %591 = vmatpush1.msra.mxu0 %v95
    %592 = vmatprep.subr.mxu0 0.0
    %593 = vmatpush1.msra.mxu0 %v96
    %594 = vmatprep.subr.mxu0 0.0
    %595 = vmatpush1.msra.mxu0 %v97
    %596 = vmatprep.subr.mxu0 0.0
    %597 = vmatpush1.msra.mxu0 %v98
    %598 = vmatprep.subr.mxu0 0.0
    %599 = vmatpush1.msra.mxu0 %v99
    %600 = vmatprep.subr.mxu0 0.0
    %601 = vmatpush1.msra.mxu0 %v100
    %602 = vmatprep.subr.mxu0 0.0
    %603 = vmatpush1.msra.mxu0 %v101
    %604 = vmatprep.subr.mxu0 0.0
    %605 = vmatpush1.msra.mxu0 %v102
    %606 = vmatprep.subr.mxu0 0.0
    %607 = vmatpush1.msra.mxu0 %v103
    %608 = vmatprep.subr.mxu0 0.0
    %609 = vmatpush1.msra.mxu0 %v104
    %610 = vmatprep.subr.mxu0 0.0
    %611 = vmatpush1.msra.mxu0 %v105
    %612 = vmatprep.subr.mxu0 0.0
    %613 = vmatpush1.msra.mxu0 %v106
    %614 = vmatprep.subr.mxu0 0.0
    %615 = vmatpush1.msra.mxu0 %v107
    %616 = vmatprep.subr.mxu0 0.0
    %617 = vmatpush1.msra.mxu0 %v108
    %618 = vmatprep.subr.mxu0 0.0
    %619 = vmatpush1.msra.mxu0 %v109
    %620 = vmatprep.subr.mxu0 0.0
    %621 = vmatpush1.msra.mxu0 %v110
    %622 = vmatprep.subr.mxu0 0.0
    %623 = vmatpush1.msra.mxu0 %v111
    %624 = vmatprep.subr.mxu0 0.0
    %625 = vmatpush1.msra.mxu0 %v112
    %626 = vmatprep.subr.mxu0 0.0
    %627 = vmatpush1.msra.mxu0 %v113
    %628 = vmatprep.subr.mxu0 0.0
    %629 = vmatpush1.msra.mxu0 %v114
    %630 = vmatprep.subr.mxu0 0.0
    %631 = vmatpush1.msra.mxu0 %v115
    %632 = vmatprep.mubr.f32.mxu0 %v565
    %633 = vmatmul.mubr.f32.gmra.mrb[0].mxu0 %v564
    %v634 = vpop.f32.mrb[0].mxu0
    %v635 = vadd.f32 0.0, %v634
    %v636 = vpop.f32.mrb[0].mxu0
    %637 = vdwg.mxu0
    %v638 = vadd.f32 %v116, %v635
    %v639 = vxor.u32 %v638, 2147483648
    %v640 = vmul.f32 %v639, 1.442695
    %v641 = vpow.pop %v640
    %v642 = vadd.f32 %v641, 1.0
    %v643 = vrcp.pop %v642
    %v644 = vmul.f32 1.0, %v643
    %v645 = vtanh.pop %v638
    %v646 = vmul.f32 %v644, %v420
    %648 = vrot.lane.b32.xlu0 %v645, 32
    %v649 = vpop.permute.xlu0 %648
    %v651 = vmul.f32 %v644, %v649
    %653 = vrot.lane.b32.xlu0 %v651, 32
    %v654 = vpop.permute.xlu0 %653
    %v656 = vadd.f32 %v646, %v654
    %v657 = vtanh.pop %v656
    %659 = vrot.lane.b32.xlu0 %v657, 32
    %v660 = vpop.permute.xlu0 %659
    %v662 = vmul.f32 %v644, %v660
    %663 = vrot.lane.b32.xlu0 %v542, 96
    %v664 = vpop.permute.xlu0 %663
    %666 = vrot.lane.b32.xlu0 %v542, 32
    %v667 = vpop.permute.xlu0 %666
    %v669 = vsel %vm319, %v545, %v664
    %v670 = vsel %vm325, %v669, %v542
    %v671 = vsel %vm435, %v670, %v667
    %v673 = vrot.slane %v117, 4
    %v675 = vmul.f32 %v671, %v673
    %v676 = vadd.f32 %v205, %v83
    %v678 = vrot.slane %v675, 4
    %680 = vmatprep.subr.mxu0 0.0
    %681 = vmatpush1.msra.mxu0 %v67
    %682 = vmatprep.subr.mxu0 0.0
    %683 = vmatpush1.msra.mxu0 %v68
    %684 = vmatprep.subr.mxu0 0.0
    %685 = vmatpush1.msra.mxu0 %v69
    %686 = vmatprep.subr.mxu0 0.0
    %687 = vmatpush1.msra.mxu0 %v70
    %688 = vmatprep.subr.mxu0 0.0
    %689 = vmatpush1.msra.mxu0 %v71
    %690 = vmatprep.subr.mxu0 0.0
    %691 = vmatpush1.msra.mxu0 %v72
    %692 = vmatprep.subr.mxu0 0.0
    %693 = vmatpush1.msra.mxu0 %v73
    %694 = vmatprep.subr.mxu0 0.0
    %695 = vmatpush1.msra.mxu0 %v74
    %696 = vmatprep.subr.mxu0 0.0
    %697 = vmatpush1.msra.mxu0 %v75
    %698 = vmatprep.subr.mxu0 0.0
    %699 = vmatpush1.msra.mxu0 %v76
    %700 = vmatprep.subr.mxu0 0.0
    %701 = vmatpush1.msra.mxu0 %v77
    %702 = vmatprep.subr.mxu0 0.0
    %703 = vmatpush1.msra.mxu0 %v78
    %704 = vmatprep.subr.mxu0 0.0
    %705 = vmatpush1.msra.mxu0 %v79
    %706 = vmatprep.subr.mxu0 0.0
    %707 = vmatpush1.msra.mxu0 %v80
    %708 = vmatprep.subr.mxu0 0.0
    %709 = vmatpush1.msra.mxu0 %v81
    %710 = vmatprep.subr.mxu0 0.0
    %711 = vmatpush1.msra.mxu0 %v82
    %712 = vmatprep.subr.mxu0 0.0
    %713 = vmatpush1.msra.mxu0 0.0
    %714 = vmatprep.subr.mxu0 0.0
    %715 = vmatpush1.msra.mxu0 0.0
    %716 = vmatprep.subr.mxu0 0.0
    %717 = vmatpush1.msra.mxu0 0.0
    %718 = vmatprep.subr.mxu0 0.0
    %719 = vmatpush1.msra.mxu0 0.0
    %720 = vmatprep.subr.mxu0 0.0
    %721 = vmatpush1.msra.mxu0 0.0
    %722 = vmatprep.subr.mxu0 0.0
    %723 = vmatpush1.msra.mxu0 0.0
    %724 = vmatprep.subr.mxu0 0.0
    %725 = vmatpush1.msra.mxu0 0.0
    %726 = vmatprep.subr.mxu0 0.0
    %727 = vmatpush1.msra.mxu0 0.0
    %728 = vmatprep.subr.mxu0 0.0
    %729 = vmatpush1.msra.mxu0 0.0
    %730 = vmatprep.subr.mxu0 0.0
    %731 = vmatpush1.msra.mxu0 0.0
    %732 = vmatprep.subr.mxu0 0.0
    %733 = vmatpush1.msra.mxu0 0.0
    %734 = vmatprep.subr.mxu0 0.0
    %735 = vmatpush1.msra.mxu0 0.0
    %736 = vmatprep.subr.mxu0 0.0
    %737 = vmatpush1.msra.mxu0 0.0
    %738 = vmatprep.subr.mxu0 0.0
    %739 = vmatpush1.msra.mxu0 0.0
    %740 = vmatprep.subr.mxu0 0.0
    %741 = vmatpush1.msra.mxu0 0.0
    %742 = vmatprep.subr.mxu0 0.0
    %743 = vmatpush1.msra.mxu0 0.0
    %744 = vmatprep.mubr.f32.mxu0 0.0
    %745 = vmatmul.mubr.f32.gmra.mrb[0].mxu0 %v678
    %v746 = vpop.f32.mrb[0].mxu0
    %v747 = vadd.f32 0.0, %v746
    %v748 = vpop.f32.mrb[0].mxu0
    %749 = vdwg.mxu0
    %v750 = vadd.f32 %v676, %v747
    %v751 = vxor.u32 %v750, 2147483648
    %v752 = vmul.f32 %v751, 1.442695
    %v753 = vpow.pop %v752
    %v754 = vadd.f32 %v753, 1.0
    %v755 = vrcp.pop %v754
    %v756 = vmul.f32 1.0, %v755
    %v757 = vtanh.pop %v750
    %v759 = vrot.slane %v536, 4
    %v761 = vmul.f32 %v756, %v759
    %763 = vrot.lane.b32.xlu0 %v757, 32
    %v764 = vpop.permute.xlu0 %763
    %v766 = vmul.f32 %v756, %v764
    %768 = vrot.lane.b32.xlu0 %v766, 32
    %v769 = vpop.permute.xlu0 %768
    %v771 = vadd.f32 %v761, %v769
    %v772 = vtanh.pop %v771
    %774 = vrot.lane.b32.xlu0 %v772, 32
    %v775 = vpop.permute.xlu0 %774
    %v777 = vmul.f32 %v756, %v775
    %779 = vrot.lane.b32.xlu0 %v777, 64
    %v780 = vpop.permute.xlu0 %779
    %783 = vrot.lane.b32.xlu0 %v662, 96
    %v784 = vpop.permute.xlu0 %783
    %v786 = vsel %vm319, %v780, %v784
    %788 = vrot.lane.b32.xlu0 %v786, 64
    %v789 = vpop.permute.xlu0 %788
    %v791 = vsel %vm325, %v786, %v789
    %v792 = vmul.f32 %v791, %v118
    %v793 = vmul.f32 %v791, %v328
    %794 = vmatprep.subr.mxu0 0.0
    %795 = vmatpush1.msra.mxu0 %v84
    %796 = vmatprep.subr.mxu0 0.0
    %797 = vmatpush1.msra.mxu0 %v85
    %798 = vmatprep.subr.mxu0 0.0
    %799 = vmatpush1.msra.mxu0 %v86
    %800 = vmatprep.subr.mxu0 0.0
    %801 = vmatpush1.msra.mxu0 %v87
    %802 = vmatprep.subr.mxu0 0.0
    %803 = vmatpush1.msra.mxu0 %v88
    %804 = vmatprep.subr.mxu0 0.0
    %805 = vmatpush1.msra.mxu0 %v89
    %806 = vmatprep.subr.mxu0 0.0
    %807 = vmatpush1.msra.mxu0 %v90
    %808 = vmatprep.subr.mxu0 0.0
    %809 = vmatpush1.msra.mxu0 %v91
    %810 = vmatprep.subr.mxu0 0.0
    %811 = vmatpush1.msra.mxu0 %v92
    %812 = vmatprep.subr.mxu0 0.0
    %813 = vmatpush1.msra.mxu0 %v93
    %814 = vmatprep.subr.mxu0 0.0
    %815 = vmatpush1.msra.mxu0 %v94
    %816 = vmatprep.subr.mxu0 0.0
    %817 = vmatpush1.msra.mxu0 %v95
    %818 = vmatprep.subr.mxu0 0.0
    %819 = vmatpush1.msra.mxu0 %v96
    %820 = vmatprep.subr.mxu0 0.0
    %821 = vmatpush1.msra.mxu0 %v97
    %822 = vmatprep.subr.mxu0 0.0
    %823 = vmatpush1.msra.mxu0 %v98
    %824 = vmatprep.subr.mxu0 0.0
    %825 = vmatpush1.msra.mxu0 %v99
    %826 = vmatprep.subr.mxu0 0.0
    %827 = vmatpush1.msra.mxu0 %v100
    %828 = vmatprep.subr.mxu0 0.0
    %829 = vmatpush1.msra.mxu0 %v101
    %830 = vmatprep.subr.mxu0 0.0
    %831 = vmatpush1.msra.mxu0 %v102
    %832 = vmatprep.subr.mxu0 0.0
    %833 = vmatpush1.msra.mxu0 %v103
    %834 = vmatprep.subr.mxu0 0.0
    %835 = vmatpush1.msra.mxu0 %v104
    %836 = vmatprep.subr.mxu0 0.0
    %837 = vmatpush1.msra.mxu0 %v105
    %838 = vmatprep.subr.mxu0 0.0
    %839 = vmatpush1.msra.mxu0 %v106
    %840 = vmatprep.subr.mxu0 0.0
    %841 = vmatpush1.msra.mxu0 %v107
    %842 = vmatprep.subr.mxu0 0.0
    %843 = vmatpush1.msra.mxu0 %v108
    %844 = vmatprep.subr.mxu0 0.0
    %845 = vmatpush1.msra.mxu0 %v109
    %846 = vmatprep.subr.mxu0 0.0
    %847 = vmatpush1.msra.mxu0 %v110
    %848 = vmatprep.subr.mxu0 0.0
    %849 = vmatpush1.msra.mxu0 %v111
    %850 = vmatprep.subr.mxu0 0.0
    %851 = vmatpush1.msra.mxu0 %v112
    %852 = vmatprep.subr.mxu0 0.0
    %853 = vmatpush1.msra.mxu0 %v113
    %854 = vmatprep.subr.mxu0 0.0
    %855 = vmatpush1.msra.mxu0 %v114
    %856 = vmatprep.subr.mxu0 0.0
    %857 = vmatpush1.msra.mxu0 %v115
    %858 = vmatprep.mubr.f32.mxu0 %v793
    %859 = vmatmul.mubr.f32.gmra.mrb[0].mxu0 %v792
    %v860 = vpop.f32.mrb[0].mxu0
    %v861 = vadd.f32 0.0, %v860
    %v862 = vpop.f32.mrb[0].mxu0
    %863 = vdwg.mxu0
    %v864 = vadd.f32 %v116, %v861
    %v865 = vxor.u32 %v864, 2147483648
    %v866 = vmul.f32 %v865, 1.442695
    %v867 = vpow.pop %v866
    %v868 = vadd.f32 %v867, 1.0
    %v869 = vrcp.pop %v868
    %v870 = vmul.f32 1.0, %v869
    %v871 = vtanh.pop %v864
    %v872 = vmul.f32 %v870, %v656
    %874 = vrot.lane.b32.xlu0 %v871, 32
    %v875 = vpop.permute.xlu0 %874
    %v877 = vmul.f32 %v870, %v875
    %879 = vrot.lane.b32.xlu0 %v877, 32
    %v880 = vpop.permute.xlu0 %879
    %v882 = vadd.f32 %v872, %v880
    %v883 = vtanh.pop %v882
    %885 = vrot.lane.b32.xlu0 %v883, 32
    %v886 = vpop.permute.xlu0 %885
    %v888 = vmul.f32 %v870, %v886
    %889 = vrot.lane.b32.xlu0 %v777, 96
    %v890 = vpop.permute.xlu0 %889
    %892 = vrot.lane.b32.xlu0 %v777, 32
    %v893 = vpop.permute.xlu0 %892
    %v895 = vsel %vm319, %v780, %v890
    %v896 = vsel %vm325, %v895, %v777
    %v897 = vsel %vm435, %v896, %v893
    %v898 = vmul.f32 %v897, %v117
    %v899 = vadd.f32 %v205, %v439
    %900 = vmatprep.subr.mxu0 0.0
    %901 = vmatpush1.msra.mxu0 %v67
    %902 = vmatprep.subr.mxu0 0.0
    %903 = vmatpush1.msra.mxu0 %v68
    %904 = vmatprep.subr.mxu0 0.0
    %905 = vmatpush1.msra.mxu0 %v69
    %906 = vmatprep.subr.mxu0 0.0
    %907 = vmatpush1.msra.mxu0 %v70
    %908 = vmatprep.subr.mxu0 0.0
    %909 = vmatpush1.msra.mxu0 %v71
    %910 = vmatprep.subr.mxu0 0.0
    %911 = vmatpush1.msra.mxu0 %v72
    %912 = vmatprep.subr.mxu0 0.0
    %913 = vmatpush1.msra.mxu0 %v73
    %914 = vmatprep.subr.mxu0 0.0
    %915 = vmatpush1.msra.mxu0 %v74
    %916 = vmatprep.subr.mxu0 0.0
    %917 = vmatpush1.msra.mxu0 %v75
    %918 = vmatprep.subr.mxu0 0.0
    %919 = vmatpush1.msra.mxu0 %v76
    %920 = vmatprep.subr.mxu0 0.0
    %921 = vmatpush1.msra.mxu0 %v77
    %922 = vmatprep.subr.mxu0 0.0
    %923 = vmatpush1.msra.mxu0 %v78
    %924 = vmatprep.subr.mxu0 0.0
    %925 = vmatpush1.msra.mxu0 %v79
    %926 = vmatprep.subr.mxu0 0.0
    %927 = vmatpush1.msra.mxu0 %v80
    %928 = vmatprep.subr.mxu0 0.0
    %929 = vmatpush1.msra.mxu0 %v81
    %930 = vmatprep.subr.mxu0 0.0
    %931 = vmatpush1.msra.mxu0 %v82
    %932 = vmatprep.subr.mxu0 0.0
    %933 = vmatpush1.msra.mxu0 0.0
    %934 = vmatprep.subr.mxu0 0.0
    %935 = vmatpush1.msra.mxu0 0.0
    %936 = vmatprep.subr.mxu0 0.0
    %937 = vmatpush1.msra.mxu0 0.0
    %938 = vmatprep.subr.mxu0 0.0
    %939 = vmatpush1.msra.mxu0 0.0
    %940 = vmatprep.subr.mxu0 0.0
    %941 = vmatpush1.msra.mxu0 0.0
    %942 = vmatprep.subr.mxu0 0.0
    %943 = vmatpush1.msra.mxu0 0.0
    %944 = vmatprep.subr.mxu0 0.0
    %945 = vmatpush1.msra.mxu0 0.0
    %946 = vmatprep.subr.mxu0 0.0
    %947 = vmatpush1.msra.mxu0 0.0
    %948 = vmatprep.subr.mxu0 0.0
    %949 = vmatpush1.msra.mxu0 0.0
    %950 = vmatprep.subr.mxu0 0.0
    %951 = vmatpush1.msra.mxu0 0.0
    %952 = vmatprep.subr.mxu0 0.0
    %953 = vmatpush1.msra.mxu0 0.0
    %954 = vmatprep.subr.mxu0 0.0
    %955 = vmatpush1.msra.mxu0 0.0
    %956 = vmatprep.subr.mxu0 0.0
    %957 = vmatpush1.msra.mxu0 0.0
    %958 = vmatprep.subr.mxu0 0.0
    %959 = vmatpush1.msra.mxu0 0.0
    %960 = vmatprep.subr.mxu0 0.0
    %961 = vmatpush1.msra.mxu0 0.0
    %962 = vmatprep.subr.mxu0 0.0
    %963 = vmatpush1.msra.mxu0 0.0
    %964 = vmatprep.mubr.f32.mxu0 0.0
    %965 = vmatmul.mubr.f32.gmra.mrb[0].mxu0 %v898
    %v966 = vpop.f32.mrb[0].mxu0
    %v967 = vadd.f32 0.0, %v966
    %v968 = vpop.f32.mrb[0].mxu0
    %969 = vdwg.mxu0
    %v971 = vrot.slane %v967, 4
    %v973 = vadd.f32 %v899, %v971
    %v974 = vxor.u32 %v973, 2147483648
    %v975 = vmul.f32 %v974, 1.442695
    %v976 = vpow.pop %v975
    %v977 = vadd.f32 %v976, 1.0
    %v978 = vrcp.pop %v977
    %v979 = vmul.f32 1.0, %v978
    %v980 = vtanh.pop %v973
    %v982 = vrot.slane %v771, 4
    %v984 = vmul.f32 %v979, %v982
    %986 = vrot.lane.b32.xlu0 %v980, 32
    %v987 = vpop.permute.xlu0 %986
    %v989 = vmul.f32 %v979, %v987
    %991 = vrot.lane.b32.xlu0 %v989, 32
    %v992 = vpop.permute.xlu0 %991
    %v994 = vadd.f32 %v984, %v992
    %v995 = vtanh.pop %v994
    %997 = vrot.lane.b32.xlu0 %v995, 32
    %v998 = vpop.permute.xlu0 %997
    %v1000 = vmul.f32 %v979, %v998
    %1002 = vrot.lane.b32.xlu0 %v1000, 64
    %v1003 = vpop.permute.xlu0 %1002
    %v1006 = vrot.slane %v888, 4
    %1007 = vrot.lane.b32.xlu0 %v1006, 96
    %v1008 = vpop.permute.xlu0 %1007
    %v1010 = vsel %vm319, %v1003, %v1008
    %1012 = vrot.lane.b32.xlu0 %v1010, 64
    %v1013 = vpop.permute.xlu0 %1012
    %v1015 = vsel %vm325, %v1010, %v1013
    %v1016 = vmul.f32 %v1015, %v558
    %v1017 = vmul.f32 %v1015, %v118
    %v1020 = vrot.slane %v1016, 4
    %v1021 = vrot.slane %v1017, 4
    %1024 = vmatprep.subr.mxu0 0.0
    %1025 = vmatpush1.msra.mxu0 %v84
    %1026 = vmatprep.subr.mxu0 0.0
    %1027 = vmatpush1.msra.mxu0 %v85
    %1028 = vmatprep.subr.mxu0 0.0
    %1029 = vmatpush1.msra.mxu0 %v86
    %1030 = vmatprep.subr.mxu0 0.0
    %1031 = vmatpush1.msra.mxu0 %v87
    %1032 = vmatprep.subr.mxu0 0.0
    %1033 = vmatpush1.msra.mxu0 %v88
    %1034 = vmatprep.subr.mxu0 0.0
    %1035 = vmatpush1.msra.mxu0 %v89
    %1036 = vmatprep.subr.mxu0 0.0
    %1037 = vmatpush1.msra.mxu0 %v90
    %1038 = vmatprep.subr.mxu0 0.0
    %1039 = vmatpush1.msra.mxu0 %v91
    %1040 = vmatprep.subr.mxu0 0.0
    %1041 = vmatpush1.msra.mxu0 %v92
    %1042 = vmatprep.subr.mxu0 0.0
    %1043 = vmatpush1.msra.mxu0 %v93
    %1044 = vmatprep.subr.mxu0 0.0
    %1045 = vmatpush1.msra.mxu0 %v94
    %1046 = vmatprep.subr.mxu0 0.0
    %1047 = vmatpush1.msra.mxu0 %v95
    %1048 = vmatprep.subr.mxu0 0.0
    %1049 = vmatpush1.msra.mxu0 %v96
    %1050 = vmatprep.subr.mxu0 0.0
    %1051 = vmatpush1.msra.mxu0 %v97
    %1052 = vmatprep.subr.mxu0 0.0
    %1053 = vmatpush1.msra.mxu0 %v98
    %1054 = vmatprep.subr.mxu0 0.0
    %1055 = vmatpush1.msra.mxu0 %v99
    %1056 = vmatprep.subr.mxu0 0.0
    %1057 = vmatpush1.msra.mxu0 %v100
    %1058 = vmatprep.subr.mxu0 0.0
    %1059 = vmatpush1.msra.mxu0 %v101
    %1060 = vmatprep.subr.mxu0 0.0
    %1061 = vmatpush1.msra.mxu0 %v102
    %1062 = vmatprep.subr.mxu0 0.0
    %1063 = vmatpush1.msra.mxu0 %v103
    %1064 = vmatprep.subr.mxu0 0.0
    %1065 = vmatpush1.msra.mxu0 %v104
    %1066 = vmatprep.subr.mxu0 0.0
    %1067 = vmatpush1.msra.mxu0 %v105
    %1068 = vmatprep.subr.mxu0 0.0
    %1069 = vmatpush1.msra.mxu0 %v106
    %1070 = vmatprep.subr.mxu0 0.0
    %1071 = vmatpush1.msra.mxu0 %v107
    %1072 = vmatprep.subr.mxu0 0.0
    %1073 = vmatpush1.msra.mxu0 %v108
    %1074 = vmatprep.subr.mxu0 0.0
    %1075 = vmatpush1.msra.mxu0 %v109
    %1076 = vmatprep.subr.mxu0 0.0
    %1077 = vmatpush1.msra.mxu0 %v110
    %1078 = vmatprep.subr.mxu0 0.0
    %1079 = vmatpush1.msra.mxu0 %v111
    %1080 = vmatprep.subr.mxu0 0.0
    %1081 = vmatpush1.msra.mxu0 %v112
    %1082 = vmatprep.subr.mxu0 0.0
    %1083 = vmatpush1.msra.mxu0 %v113
    %1084 = vmatprep.subr.mxu0 0.0
    %1085 = vmatpush1.msra.mxu0 %v114
    %1086 = vmatprep.subr.mxu0 0.0
    %1087 = vmatpush1.msra.mxu0 %v115
    %1088 = vmatprep.mubr.f32.mxu0 %v1021
    %1089 = vmatmul.mubr.f32.gmra.mrb[0].mxu0 %v1020
    %v1090 = vpop.f32.mrb[0].mxu0
    %v1091 = vadd.f32 0.0, %v1090
    %v1092 = vpop.f32.mrb[0].mxu0
    %1093 = vdwg.mxu0
    %v1094 = vadd.f32 %v116, %v1091
    %v1095 = vxor.u32 %v1094, 2147483648
    %v1096 = vmul.f32 %v1095, 1.442695
    %v1097 = vpow.pop %v1096
    %v1098 = vadd.f32 %v1097, 1.0
    %v1099 = vrcp.pop %v1098
    %v1100 = vmul.f32 1.0, %v1099
    %v1101 = vtanh.pop %v1094
    %v1102 = vmul.f32 %v1100, %v882
    %1104 = vrot.lane.b32.xlu0 %v1101, 32
    %v1105 = vpop.permute.xlu0 %1104
    %v1107 = vmul.f32 %v1100, %v1105
    %1109 = vrot.lane.b32.xlu0 %v1107, 32
    %v1110 = vpop.permute.xlu0 %1109
    %v1112 = vadd.f32 %v1102, %v1110
    %v1113 = vtanh.pop %v1112
    %1115 = vrot.lane.b32.xlu0 %v1113, 32
    %v1116 = vpop.permute.xlu0 %1115
    %v1118 = vmul.f32 %v1100, %v1116
    %1119 = vrot.lane.b32.xlu0 %v1000, 96
    %v1120 = vpop.permute.xlu0 %1119
    %1122 = vrot.lane.b32.xlu0 %v1000, 32
    %v1123 = vpop.permute.xlu0 %1122
    %v1125 = vsel %vm319, %v1003, %v1120
    %v1126 = vsel %vm325, %v1125, %v1000
    %v1127 = vsel %vm435, %v1126, %v1123
    %v1128 = vmul.f32 %v1127, %v673
    %v1129 = vadd.f32 %v210, %v83
    %v1131 = vrot.slane %v1128, 4
    %1133 = vmatprep.subr.mxu0 0.0
    %1134 = vmatpush1.msra.mxu0 %v67
    %1135 = vmatprep.subr.mxu0 0.0
    %1136 = vmatpush1.msra.mxu0 %v68
    %1137 = vmatprep.subr.mxu0 0.0
    %1138 = vmatpush1.msra.mxu0 %v69
    %1139 = vmatprep.subr.mxu0 0.0
    %1140 = vmatpush1.msra.mxu0 %v70
    %1141 = vmatprep.subr.mxu0 0.0
    %1142 = vmatpush1.msra.mxu0 %v71
    %1143 = vmatprep.subr.mxu0 0.0
    %1144 = vmatpush1.msra.mxu0 %v72
    %1145 = vmatprep.subr.mxu0 0.0
    %1146 = vmatpush1.msra.mxu0 %v73
    %1147 = vmatprep.subr.mxu0 0.0
    %1148 = vmatpush1.msra.mxu0 %v74
    %1149 = vmatprep.subr.mxu0 0.0
    %1150 = vmatpush1.msra.mxu0 %v75
    %1151 = vmatprep.subr.mxu0 0.0
    %1152 = vmatpush1.msra.mxu0 %v76
    %1153 = vmatprep.subr.mxu0 0.0
    %1154 = vmatpush1.msra.mxu0 %v77
    %1155 = vmatprep.subr.mxu0 0.0
    %1156 = vmatpush1.msra.mxu0 %v78
    %1157 = vmatprep.subr.mxu0 0.0
    %1158 = vmatpush1.msra.mxu0 %v79
    %1159 = vmatprep.subr.mxu0 0.0
    %1160 = vmatpush1.msra.mxu0 %v80
    %1161 = vmatprep.subr.mxu0 0.0
    %1162 = vmatpush1.msra.mxu0 %v81
    %1163 = vmatprep.subr.mxu0 0.0
    %1164 = vmatpush1.msra.mxu0 %v82
    %1165 = vmatprep.subr.mxu0 0.0
    %1166 = vmatpush1.msra.mxu0 0.0
    %1167 = vmatprep.subr.mxu0 0.0
    %1168 = vmatpush1.msra.mxu0 0.0
    %1169 = vmatprep.subr.mxu0 0.0
    %1170 = vmatpush1.msra.mxu0 0.0
    %1171 = vmatprep.subr.mxu0 0.0
    %1172 = vmatpush1.msra.mxu0 0.0
    %1173 = vmatprep.subr.mxu0 0.0
    %1174 = vmatpush1.msra.mxu0 0.0
    %1175 = vmatprep.subr.mxu0 0.0
    %1176 = vmatpush1.msra.mxu0 0.0
    %1177 = vmatprep.subr.mxu0 0.0
    %1178 = vmatpush1.msra.mxu0 0.0
    %1179 = vmatprep.subr.mxu0 0.0
    %1180 = vmatpush1.msra.mxu0 0.0
    %1181 = vmatprep.subr.mxu0 0.0
    %1182 = vmatpush1.msra.mxu0 0.0
    %1183 = vmatprep.subr.mxu0 0.0
    %1184 = vmatpush1.msra.mxu0 0.0
    %1185 = vmatprep.subr.mxu0 0.0
    %1186 = vmatpush1.msra.mxu0 0.0
    %1187 = vmatprep.subr.mxu0 0.0
    %1188 = vmatpush1.msra.mxu0 0.0
    %1189 = vmatprep.subr.mxu0 0.0
    %1190 = vmatpush1.msra.mxu0 0.0
    %1191 = vmatprep.subr.mxu0 0.0
    %1192 = vmatpush1.msra.mxu0 0.0
    %1193 = vmatprep.subr.mxu0 0.0
    %1194 = vmatpush1.msra.mxu0 0.0
    %1195 = vmatprep.subr.mxu0 0.0
    %1196 = vmatpush1.msra.mxu0 0.0
    %1197 = vmatprep.mubr.f32.mxu0 0.0
    %1198 = vmatmul.mubr.f32.gmra.mrb[0].mxu0 %v1131
    %v1199 = vpop.f32.mrb[0].mxu0
    %v1200 = vadd.f32 0.0, %v1199
    %v1201 = vpop.f32.mrb[0].mxu0
    %1202 = vdwg.mxu0
    %v1203 = vadd.f32 %v1129, %v1200
    %v1204 = vxor.u32 %v1203, 2147483648
    %v1205 = vmul.f32 %v1204, 1.442695
    %v1206 = vpow.pop %v1205
    %v1207 = vadd.f32 %v1206, 1.0
    %v1208 = vrcp.pop %v1207
    %v1209 = vmul.f32 1.0, %v1208
    %v1210 = vtanh.pop %v1203
    %v1212 = vrot.slane %v994, 4
    %v1214 = vmul.f32 %v1209, %v1212
    %1216 = vrot.lane.b32.xlu0 %v1210, 32
    %v1217 = vpop.permute.xlu0 %1216
    %v1219 = vmul.f32 %v1209, %v1217
    %1221 = vrot.lane.b32.xlu0 %v1219, 32
    %v1222 = vpop.permute.xlu0 %1221
    %v1224 = vadd.f32 %v1214, %v1222
    %v1225 = vtanh.pop %v1224
    %1227 = vrot.lane.b32.xlu0 %v1225, 32
    %v1228 = vpop.permute.xlu0 %1227
    %v1230 = vmul.f32 %v1209, %v1228
    %1232 = vrot.lane.b32.xlu0 %v1230, 64
    %v1233 = vpop.permute.xlu0 %1232
    %1236 = vrot.lane.b32.xlu0 %v1118, 96
    %v1237 = vpop.permute.xlu0 %1236
    %v1239 = vsel %vm319, %v1233, %v1237
    %1241 = vrot.lane.b32.xlu0 %v1239, 64
    %v1242 = vpop.permute.xlu0 %1241
    %v1244 = vsel %vm325, %v1239, %v1242
    %v1245 = vmul.f32 %v1244, %v118
    %v1246 = vmul.f32 %v1244, %v328
    %1247 = vmatprep.subr.mxu0 0.0
    %1248 = vmatpush1.msra.mxu0 %v84
    %1249 = vmatprep.subr.mxu0 0.0
    %1250 = vmatpush1.msra.mxu0 %v85
    %1251 = vmatprep.subr.mxu0 0.0
    %1252 = vmatpush1.msra.mxu0 %v86
    %1253 = vmatprep.subr.mxu0 0.0
    %1254 = vmatpush1.msra.mxu0 %v87
    %1255 = vmatprep.subr.mxu0 0.0
    %1256 = vmatpush1.msra.mxu0 %v88
    %1257 = vmatprep.subr.mxu0 0.0
    %1258 = vmatpush1.msra.mxu0 %v89
    %1259 = vmatprep.subr.mxu0 0.0
    %1260 = vmatpush1.msra.mxu0 %v90
    %1261 = vmatprep.subr.mxu0 0.0
    %1262 = vmatpush1.msra.mxu0 %v91
    %1263 = vmatprep.subr.mxu0 0.0
    %1264 = vmatpush1.msra.mxu0 %v92
    %1265 = vmatprep.subr.mxu0 0.0
    %1266 = vmatpush1.msra.mxu0 %v93
    %1267 = vmatprep.subr.mxu0 0.0
    %1268 = vmatpush1.msra.mxu0 %v94
    %1269 = vmatprep.subr.mxu0 0.0
    %1270 = vmatpush1.msra.mxu0 %v95
    %1271 = vmatprep.subr.mxu0 0.0
    %1272 = vmatpush1.msra.mxu0 %v96
    %1273 = vmatprep.subr.mxu0 0.0
    %1274 = vmatpush1.msra.mxu0 %v97
    %1275 = vmatprep.subr.mxu0 0.0
    %1276 = vmatpush1.msra.mxu0 %v98
    %1277 = vmatprep.subr.mxu0 0.0
    %1278 = vmatpush1.msra.mxu0 %v99
    %1279 = vmatprep.subr.mxu0 0.0
    %1280 = vmatpush1.msra.mxu0 %v100
    %1281 = vmatprep.subr.mxu0 0.0
    %1282 = vmatpush1.msra.mxu0 %v101
    %1283 = vmatprep.subr.mxu0 0.0
    %1284 = vmatpush1.msra.mxu0 %v102
    %1285 = vmatprep.subr.mxu0 0.0
    %1286 = vmatpush1.msra.mxu0 %v103
    %1287 = vmatprep.subr.mxu0 0.0
    %1288 = vmatpush1.msra.mxu0 %v104
    %1289 = vmatprep.subr.mxu0 0.0
    %1290 = vmatpush1.msra.mxu0 %v105
    %1291 = vmatprep.subr.mxu0 0.0
    %1292 = vmatpush1.msra.mxu0 %v106
    %1293 = vmatprep.subr.mxu0 0.0
    %1294 = vmatpush1.msra.mxu0 %v107
    %1295 = vmatprep.subr.mxu0 0.0
    %1296 = vmatpush1.msra.mxu0 %v108
    %1297 = vmatprep.subr.mxu0 0.0
    %1298 = vmatpush1.msra.mxu0 %v109
    %1299 = vmatprep.subr.mxu0 0.0
    %1300 = vmatpush1.msra.mxu0 %v110
    %1301 = vmatprep.subr.mxu0 0.0
    %1302 = vmatpush1.msra.mxu0 %v111
    %1303 = vmatprep.subr.mxu0 0.0
    %1304 = vmatpush1.msra.mxu0 %v112
    %1305 = vmatprep.subr.mxu0 0.0
    %1306 = vmatpush1.msra.mxu0 %v113
    %1307 = vmatprep.subr.mxu0 0.0
    %1308 = vmatpush1.msra.mxu0 %v114
    %1309 = vmatprep.subr.mxu0 0.0
    %1310 = vmatpush1.msra.mxu0 %v115
    %1311 = vmatprep.mubr.f32.mxu0 %v1246
    %1312 = vmatmul.mubr.f32.gmra.mrb[0].mxu0 %v1245
    %v1313 = vpop.f32.mrb[0].mxu0
    %v1314 = vadd.f32 0.0, %v1313
    %v1315 = vpop.f32.mrb[0].mxu0
    %1316 = vdwg.mxu0
    %v1317 = vadd.f32 %v116, %v1314
    %v1318 = vxor.u32 %v1317, 2147483648
    %v1319 = vmul.f32 %v1318, 1.442695
    %v1320 = vpow.pop %v1319
    %v1321 = vadd.f32 %v1320, 1.0
    %v1322 = vrcp.pop %v1321
    %v1323 = vmul.f32 1.0, %v1322
    %v1324 = vtanh.pop %v1317
    %v1325 = vmul.f32 %v1323, %v1112
    %1327 = vrot.lane.b32.xlu0 %v1324, 32
    %v1328 = vpop.permute.xlu0 %1327
    %v1330 = vmul.f32 %v1323, %v1328
    %1332 = vrot.lane.b32.xlu0 %v1330, 32
    %v1333 = vpop.permute.xlu0 %1332
    %v1335 = vadd.f32 %v1325, %v1333
    %v1336 = vtanh.pop %v1335
    %1338 = vrot.lane.b32.xlu0 %v1336, 32
    %v1339 = vpop.permute.xlu0 %1338
    %v1341 = vmul.f32 %v1323, %v1339
    %1342 = vrot.lane.b32.xlu0 %v1230, 96
    %v1343 = vpop.permute.xlu0 %1342
    %1345 = vrot.lane.b32.xlu0 %v1230, 32
    %v1346 = vpop.permute.xlu0 %1345
    %v1348 = vsel %vm319, %v1233, %v1343
    %v1349 = vsel %vm325, %v1348, %v1230
    %v1350 = vsel %vm435, %v1349, %v1346
    %v1351 = vmul.f32 %v1350, %v117
    %v1352 = vadd.f32 %v210, %v439
    %1353 = vmatprep.subr.mxu0 0.0
    %1354 = vmatpush1.msra.mxu0 %v67
    %1355 = vmatprep.subr.mxu0 0.0
    %1356 = vmatpush1.msra.mxu0 %v68
    %1357 = vmatprep.subr.mxu0 0.0
    %1358 = vmatpush1.msra.mxu0 %v69
    %1359 = vmatprep.subr.mxu0 0.0
    %1360 = vmatpush1.msra.mxu0 %v70
    %1361 = vmatprep.subr.mxu0 0.0
    %1362 = vmatpush1.msra.mxu0 %v71
    %1363 = vmatprep.subr.mxu0 0.0
    %1364 = vmatpush1.msra.mxu0 %v72
    %1365 = vmatprep.subr.mxu0 0.0
    %1366 = vmatpush1.msra.mxu0 %v73
    %1367 = vmatprep.subr.mxu0 0.0
    %1368 = vmatpush1.msra.mxu0 %v74
    %1369 = vmatprep.subr.mxu0 0.0
    %1370 = vmatpush1.msra.mxu0 %v75
    %1371 = vmatprep.subr.mxu0 0.0
    %1372 = vmatpush1.msra.mxu0 %v76
    %1373 = vmatprep.subr.mxu0 0.0
    %1374 = vmatpush1.msra.mxu0 %v77
    %1375 = vmatprep.subr.mxu0 0.0
    %1376 = vmatpush1.msra.mxu0 %v78
    %1377 = vmatprep.subr.mxu0 0.0
    %1378 = vmatpush1.msra.mxu0 %v79
    %1379 = vmatprep.subr.mxu0 0.0
    %1380 = vmatpush1.msra.mxu0 %v80
    %1381 = vmatprep.subr.mxu0 0.0
    %1382 = vmatpush1.msra.mxu0 %v81
    %1383 = vmatprep.subr.mxu0 0.0
    %1384 = vmatpush1.msra.mxu0 %v82
    %1385 = vmatprep.subr.mxu0 0.0
    %1386 = vmatpush1.msra.mxu0 0.0
    %1387 = vmatprep.subr.mxu0 0.0
    %1388 = vmatpush1.msra.mxu0 0.0
    %1389 = vmatprep.subr.mxu0 0.0
    %1390 = vmatpush1.msra.mxu0 0.0
    %1391 = vmatprep.subr.mxu0 0.0
    %1392 = vmatpush1.msra.mxu0 0.0
    %1393 = vmatprep.subr.mxu0 0.0
    %1394 = vmatpush1.msra.mxu0 0.0
    %1395 = vmatprep.subr.mxu0 0.0
    %1396 = vmatpush1.msra.mxu0 0.0
    %1397 = vmatprep.subr.mxu0 0.0
    %1398 = vmatpush1.msra.mxu0 0.0
    %1399 = vmatprep.subr.mxu0 0.0
    %1400 = vmatpush1.msra.mxu0 0.0
    %1401 = vmatprep.subr.mxu0 0.0
    %1402 = vmatpush1.msra.mxu0 0.0
    %1403 = vmatprep.subr.mxu0 0.0
    %1404 = vmatpush1.msra.mxu0 0.0
    %1405 = vmatprep.subr.mxu0 0.0
    %1406 = vmatpush1.msra.mxu0 0.0
    %1407 = vmatprep.subr.mxu0 0.0
    %1408 = vmatpush1.msra.mxu0 0.0
    %1409 = vmatprep.subr.mxu0 0.0
    %1410 = vmatpush1.msra.mxu0 0.0
    %1411 = vmatprep.subr.mxu0 0.0
    %1412 = vmatpush1.msra.mxu0 0.0
    %1413 = vmatprep.subr.mxu0 0.0
    %1414 = vmatpush1.msra.mxu0 0.0
    %1415 = vmatprep.subr.mxu0 0.0
    %1416 = vmatpush1.msra.mxu0 0.0
    %1417 = vmatprep.mubr.f32.mxu0 0.0
    %1418 = vmatmul.mubr.f32.gmra.mrb[0].mxu0 %v1351
    %v1419 = vpop.f32.mrb[0].mxu0
    %v1420 = vadd.f32 0.0, %v1419
    %v1421 = vpop.f32.mrb[0].mxu0
    %1422 = vdwg.mxu0
    %v1424 = vrot.slane %v1420, 4
    %v1426 = vadd.f32 %v1352, %v1424
    %v1427 = vxor.u32 %v1426, 2147483648
    %v1428 = vmul.f32 %v1427, 1.442695
    %v1429 = vpow.pop %v1428
    %v1430 = vadd.f32 %v1429, 1.0
    %v1431 = vrcp.pop %v1430
    %v1432 = vmul.f32 1.0, %v1431
    %v1433 = vtanh.pop %v1426
    %v1435 = vrot.slane %v1224, 4
    %v1437 = vmul.f32 %v1432, %v1435
    %1439 = vrot.lane.b32.xlu0 %v1433, 32
    %v1440 = vpop.permute.xlu0 %1439
    %v1442 = vmul.f32 %v1432, %v1440
    %1444 = vrot.lane.b32.xlu0 %v1442, 32
    %v1445 = vpop.permute.xlu0 %1444
    %v1447 = vadd.f32 %v1437, %v1445
    %v1448 = vtanh.pop %v1447
    %1450 = vrot.lane.b32.xlu0 %v1448, 32
    %v1451 = vpop.permute.xlu0 %1450
    %v1453 = vmul.f32 %v1432, %v1451
    %1455 = vrot.lane.b32.xlu0 %v1453, 64
    %v1456 = vpop.permute.xlu0 %1455
    %v1459 = vrot.slane %v1341, 4
    %1460 = vrot.lane.b32.xlu0 %v1459, 96
    %v1461 = vpop.permute.xlu0 %1460
    %v1463 = vsel %vm319, %v1456, %v1461
    %1465 = vrot.lane.b32.xlu0 %v1463, 64
    %v1466 = vpop.permute.xlu0 %1465
    %v1468 = vsel %vm325, %v1463, %v1466
    %v1469 = vmul.f32 %v1468, %v558
    %v1470 = vmul.f32 %v1468, %v118
    %v1473 = vrot.slane %v1469, 4
    %v1474 = vrot.slane %v1470, 4
    %1477 = vmatprep.subr.mxu0 0.0
    %1478 = vmatpush1.msra.mxu0 %v84
    %1479 = vmatprep.subr.mxu0 0.0
    %1480 = vmatpush1.msra.mxu0 %v85
    %1481 = vmatprep.subr.mxu0 0.0
    %1482 = vmatpush1.msra.mxu0 %v86
    %1483 = vmatprep.subr.mxu0 0.0
    %1484 = vmatpush1.msra.mxu0 %v87
    %1485 = vmatprep.subr.mxu0 0.0
    %1486 = vmatpush1.msra.mxu0 %v88
    %1487 = vmatprep.subr.mxu0 0.0
    %1488 = vmatpush1.msra.mxu0 %v89
    %1489 = vmatprep.subr.mxu0 0.0
    %1490 = vmatpush1.msra.mxu0 %v90
    %1491 = vmatprep.subr.mxu0 0.0
    %1492 = vmatpush1.msra.mxu0 %v91
    %1493 = vmatprep.subr.mxu0 0.0
    %1494 = vmatpush1.msra.mxu0 %v92
    %1495 = vmatprep.subr.mxu0 0.0
    %1496 = vmatpush1.msra.mxu0 %v93
    %1497 = vmatprep.subr.mxu0 0.0
    %1498 = vmatpush1.msra.mxu0 %v94
    %1499 = vmatprep.subr.mxu0 0.0
    %1500 = vmatpush1.msra.mxu0 %v95
    %1501 = vmatprep.subr.mxu0 0.0
    %1502 = vmatpush1.msra.mxu0 %v96
    %1503 = vmatprep.subr.mxu0 0.0
    %1504 = vmatpush1.msra.mxu0 %v97
    %1505 = vmatprep.subr.mxu0 0.0
    %1506 = vmatpush1.msra.mxu0 %v98
    %1507 = vmatprep.subr.mxu0 0.0
    %1508 = vmatpush1.msra.mxu0 %v99
    %1509 = vmatprep.subr.mxu0 0.0
    %1510 = vmatpush1.msra.mxu0 %v100
    %1511 = vmatprep.subr.mxu0 0.0
    %1512 = vmatpush1.msra.mxu0 %v101
    %1513 = vmatprep.subr.mxu0 0.0
    %1514 = vmatpush1.msra.mxu0 %v102
    %1515 = vmatprep.subr.mxu0 0.0
    %1516 = vmatpush1.msra.mxu0 %v103
    %1517 = vmatprep.subr.mxu0 0.0
    %1518 = vmatpush1.msra.mxu0 %v104
    %1519 = vmatprep.subr.mxu0 0.0
    %1520 = vmatpush1.msra.mxu0 %v105
    %1521 = vmatprep.subr.mxu0 0.0
    %1522 = vmatpush1.msra.mxu0 %v106
    %1523 = vmatprep.subr.mxu0 0.0
    %1524 = vmatpush1.msra.mxu0 %v107
    %1525 = vmatprep.subr.mxu0 0.0
    %1526 = vmatpush1.msra.mxu0 %v108
    %1527 = vmatprep.subr.mxu0 0.0
    %1528 = vmatpush1.msra.mxu0 %v109
    %1529 = vmatprep.subr.mxu0 0.0
    %1530 = vmatpush1.msra.mxu0 %v110
    %1531 = vmatprep.subr.mxu0 0.0
    %1532 = vmatpush1.msra.mxu0 %v111
    %1533 = vmatprep.subr.mxu0 0.0
    %1534 = vmatpush1.msra.mxu0 %v112
    %1535 = vmatprep.subr.mxu0 0.0
    %1536 = vmatpush1.msra.mxu0 %v113
    %1537 = vmatprep.subr.mxu0 0.0
    %1538 = vmatpush1.msra.mxu0 %v114
    %1539 = vmatprep.subr.mxu0 0.0
    %1540 = vmatpush1.msra.mxu0 %v115
    %1541 = vmatprep.mubr.f32.mxu0 %v1474
    %1542 = vmatmul.mubr.f32.gmra.mrb[0].mxu0 %v1473
    %v1543 = vpop.f32.mrb[0].mxu0
    %v1544 = vadd.f32 0.0, %v1543
    %v1545 = vpop.f32.mrb[0].mxu0
    %1546 = vdwg.mxu0
    %v1547 = vadd.f32 %v116, %v1544
    %v1548 = vxor.u32 %v1547, 2147483648
    %v1549 = vmul.f32 %v1548, 1.442695
    %v1550 = vpow.pop %v1549
    %v1551 = vadd.f32 %v1550, 1.0
    %v1552 = vrcp.pop %v1551
    %v1553 = vmul.f32 1.0, %v1552
    %v1554 = vtanh.pop %v1547
    %v1555 = vmul.f32 %v1553, %v1335
    %1557 = vrot.lane.b32.xlu0 %v1554, 32
    %v1558 = vpop.permute.xlu0 %1557
    %v1560 = vmul.f32 %v1553, %v1558
    %1562 = vrot.lane.b32.xlu0 %v1560, 32
    %v1563 = vpop.permute.xlu0 %1562
    %v1565 = vadd.f32 %v1555, %v1563
    %v1566 = vtanh.pop %v1565
    %1568 = vrot.lane.b32.xlu0 %v1566, 32
    %v1569 = vpop.permute.xlu0 %1568
    %v1571 = vmul.f32 %v1553, %v1569
    %1572 = vrot.lane.b32.xlu0 %v1453, 96
    %v1573 = vpop.permute.xlu0 %1572
    %1575 = vrot.lane.b32.xlu0 %v1453, 32
    %v1576 = vpop.permute.xlu0 %1575
    %v1578 = vsel %vm319, %v1456, %v1573
    %v1579 = vsel %vm325, %v1578, %v1453
    %v1580 = vsel %vm435, %v1579, %v1576
    %v1581 = vmul.f32 %v1580, %v673
    %v1582 = vadd.f32 %v215, %v83
    %v1584 = vrot.slane %v1581, 4
    %1586 = vmatprep.subr.mxu0 0.0
    %1587 = vmatpush1.msra.mxu0 %v67
    %1588 = vmatprep.subr.mxu0 0.0
    %1589 = vmatpush1.msra.mxu0 %v68
    %1590 = vmatprep.subr.mxu0 0.0
    %1591 = vmatpush1.msra.mxu0 %v69
    %1592 = vmatprep.subr.mxu0 0.0
    %1593 = vmatpush1.msra.mxu0 %v70
    %1594 = vmatprep.subr.mxu0 0.0
    %1595 = vmatpush1.msra.mxu0 %v71
    %1596 = vmatprep.subr.mxu0 0.0
    %1597 = vmatpush1.msra.mxu0 %v72
    %1598 = vmatprep.subr.mxu0 0.0
    %1599 = vmatpush1.msra.mxu0 %v73
    %1600 = vmatprep.subr.mxu0 0.0
    %1601 = vmatpush1.msra.mxu0 %v74
    %1602 = vmatprep.subr.mxu0 0.0
    %1603 = vmatpush1.msra.mxu0 %v75
    %1604 = vmatprep.subr.mxu0 0.0
    %1605 = vmatpush1.msra.mxu0 %v76
    %1606 = vmatprep.subr.mxu0 0.0
    %1607 = vmatpush1.msra.mxu0 %v77
    %1608 = vmatprep.subr.mxu0 0.0
    %1609 = vmatpush1.msra.mxu0 %v78
    %1610 = vmatprep.subr.mxu0 0.0
    %1611 = vmatpush1.msra.mxu0 %v79
    %1612 = vmatprep.subr.mxu0 0.0
    %1613 = vmatpush1.msra.mxu0 %v80
    %1614 = vmatprep.subr.mxu0 0.0
    %1615 = vmatpush1.msra.mxu0 %v81
    %1616 = vmatprep.subr.mxu0 0.0
    %1617 = vmatpush1.msra.mxu0 %v82
    %1618 = vmatprep.subr.mxu0 0.0
    %1619 = vmatpush1.msra.mxu0 0.0
    %1620 = vmatprep.subr.mxu0 0.0
    %1621 = vmatpush1.msra.mxu0 0.0
    %1622 = vmatprep.subr.mxu0 0.0
    %1623 = vmatpush1.msra.mxu0 0.0
    %1624 = vmatprep.subr.mxu0 0.0
    %1625 = vmatpush1.msra.mxu0 0.0
    %1626 = vmatprep.subr.mxu0 0.0
    %1627 = vmatpush1.msra.mxu0 0.0
    %1628 = vmatprep.subr.mxu0 0.0
    %1629 = vmatpush1.msra.mxu0 0.0
    %1630 = vmatprep.subr.mxu0 0.0
    %1631 = vmatpush1.msra.mxu0 0.0
    %1632 = vmatprep.subr.mxu0 0.0
    %1633 = vmatpush1.msra.mxu0 0.0
    %1634 = vmatprep.subr.mxu0 0.0
    %1635 = vmatpush1.msra.mxu0 0.0
    %1636 = vmatprep.subr.mxu0 0.0
    %1637 = vmatpush1.msra.mxu0 0.0
    %1638 = vmatprep.subr.mxu0 0.0
    %1639 = vmatpush1.msra.mxu0 0.0
    %1640 = vmatprep.subr.mxu0 0.0
    %1641 = vmatpush1.msra.mxu0 0.0
    %1642 = vmatprep.subr.mxu0 0.0
    %1643 = vmatpush1.msra.mxu0 0.0
    %1644 = vmatprep.subr.mxu0 0.0
    %1645 = vmatpush1.msra.mxu0 0.0
    %1646 = vmatprep.subr.mxu0 0.0
    %1647 = vmatpush1.msra.mxu0 0.0
    %1648 = vmatprep.subr.mxu0 0.0
    %1649 = vmatpush1.msra.mxu0 0.0
    %1650 = vmatprep.mubr.f32.mxu0 0.0
    %1651 = vmatmul.mubr.f32.gmra.mrb[0].mxu0 %v1584
    %v1652 = vpop.f32.mrb[0].mxu0
    %v1653 = vadd.f32 0.0, %v1652
    %v1654 = vpop.f32.mrb[0].mxu0
    %1655 = vdwg.mxu0
    %v1656 = vadd.f32 %v1582, %v1653
    %v1657 = vxor.u32 %v1656, 2147483648
    %v1658 = vmul.f32 %v1657, 1.442695
    %v1659 = vpow.pop %v1658
    %v1660 = vadd.f32 %v1659, 1.0
    %v1661 = vrcp.pop %v1660
    %v1662 = vmul.f32 1.0, %v1661
    %v1663 = vtanh.pop %v1656
    %v1665 = vrot.slane %v1447, 4
    %v1667 = vmul.f32 %v1662, %v1665
    %1669 = vrot.lane.b32.xlu0 %v1663, 32
    %v1670 = vpop.permute.xlu0 %1669
    %v1672 = vmul.f32 %v1662, %v1670
    %1674 = vrot.lane.b32.xlu0 %v1672, 32
    %v1675 = vpop.permute.xlu0 %1674
    %v1677 = vadd.f32 %v1667, %v1675
    %v1678 = vtanh.pop %v1677
    %1680 = vrot.lane.b32.xlu0 %v1678, 32
    %v1681 = vpop.permute.xlu0 %1680
    %v1683 = vmul.f32 %v1662, %v1681
    %1685 = vrot.lane.b32.xlu0 %v1683, 64
    %v1686 = vpop.permute.xlu0 %1685
    %1689 = vrot.lane.b32.xlu0 %v1571, 96
    %v1690 = vpop.permute.xlu0 %1689
    %v1692 = vsel %vm319, %v1686, %v1690
    %1694 = vrot.lane.b32.xlu0 %v1692, 64
    %v1695 = vpop.permute.xlu0 %1694
    %v1697 = vsel %vm325, %v1692, %v1695
    %v1698 = vmul.f32 %v1697, %v118
    %v1699 = vmul.f32 %v1697, %v328
    %1700 = vmatprep.subr.mxu0 0.0
    %1701 = vmatpush1.msra.mxu0 %v84
    %1702 = vmatprep.subr.mxu0 0.0
    %1703 = vmatpush1.msra.mxu0 %v85
    %1704 = vmatprep.subr.mxu0 0.0
    %1705 = vmatpush1.msra.mxu0 %v86
    %1706 = vmatprep.subr.mxu0 0.0
    %1707 = vmatpush1.msra.mxu0 %v87
    %1708 = vmatprep.subr.mxu0 0.0
    %1709 = vmatpush1.msra.mxu0 %v88
    %1710 = vmatprep.subr.mxu0 0.0
    %1711 = vmatpush1.msra.mxu0 %v89
    %1712 = vmatprep.subr.mxu0 0.0
    %1713 = vmatpush1.msra.mxu0 %v90
    %1714 = vmatprep.subr.mxu0 0.0
    %1715 = vmatpush1.msra.mxu0 %v91
    %1716 = vmatprep.subr.mxu0 0.0
    %1717 = vmatpush1.msra.mxu0 %v92
    %1718 = vmatprep.subr.mxu0 0.0
    %1719 = vmatpush1.msra.mxu0 %v93
    %1720 = vmatprep.subr.mxu0 0.0
    %1721 = vmatpush1.msra.mxu0 %v94
    %1722 = vmatprep.subr.mxu0 0.0
    %1723 = vmatpush1.msra.mxu0 %v95
    %1724 = vmatprep.subr.mxu0 0.0
    %1725 = vmatpush1.msra.mxu0 %v96
    %1726 = vmatprep.subr.mxu0 0.0
    %1727 = vmatpush1.msra.mxu0 %v97
    %1728 = vmatprep.subr.mxu0 0.0
    %1729 = vmatpush1.msra.mxu0 %v98
    %1730 = vmatprep.subr.mxu0 0.0
    %1731 = vmatpush1.msra.mxu0 %v99
    %1732 = vmatprep.subr.mxu0 0.0
    %1733 = vmatpush1.msra.mxu0 %v100
    %1734 = vmatprep.subr.mxu0 0.0
    %1735 = vmatpush1.msra.mxu0 %v101
    %1736 = vmatprep.subr.mxu0 0.0
    %1737 = vmatpush1.msra.mxu0 %v102
    %1738 = vmatprep.subr.mxu0 0.0
    %1739 = vmatpush1.msra.mxu0 %v103
    %1740 = vmatprep.subr.mxu0 0.0
    %1741 = vmatpush1.msra.mxu0 %v104
    %1742 = vmatprep.subr.mxu0 0.0
    %1743 = vmatpush1.msra.mxu0 %v105
    %1744 = vmatprep.subr.mxu0 0.0
    %1745 = vmatpush1.msra.mxu0 %v106
    %1746 = vmatprep.subr.mxu0 0.0
    %1747 = vmatpush1.msra.mxu0 %v107
    %1748 = vmatprep.subr.mxu0 0.0
    %1749 = vmatpush1.msra.mxu0 %v108
    %1750 = vmatprep.subr.mxu0 0.0
    %1751 = vmatpush1.msra.mxu0 %v109
    %1752 = vmatprep.subr.mxu0 0.0
    %1753 = vmatpush1.msra.mxu0 %v110
    %1754 = vmatprep.subr.mxu0 0.0
    %1755 = vmatpush1.msra.mxu0 %v111
    %1756 = vmatprep.subr.mxu0 0.0
    %1757 = vmatpush1.msra.mxu0 %v112
    %1758 = vmatprep.subr.mxu0 0.0
    %1759 = vmatpush1.msra.mxu0 %v113
    %1760 = vmatprep.subr.mxu0 0.0
    %1761 = vmatpush1.msra.mxu0 %v114
    %1762 = vmatprep.subr.mxu0 0.0
    %1763 = vmatpush1.msra.mxu0 %v115
    %1764 = vmatprep.mubr.f32.mxu0 %v1699
    %1765 = vmatmul.mubr.f32.gmra.mrb[0].mxu0 %v1698
    %v1766 = vpop.f32.mrb[0].mxu0
    %v1767 = vadd.f32 0.0, %v1766
    %v1768 = vpop.f32.mrb[0].mxu0
    %1769 = vdwg.mxu0
    %v1770 = vadd.f32 %v116, %v1767
    %v1771 = vxor.u32 %v1770, 2147483648
    %v1772 = vmul.f32 %v1771, 1.442695
    %v1773 = vpow.pop %v1772
    %v1774 = vadd.f32 %v1773, 1.0
    %v1775 = vrcp.pop %v1774
    %v1776 = vmul.f32 1.0, %v1775
    %v1777 = vtanh.pop %v1770
    %v1778 = vmul.f32 %v1776, %v1565
    %1780 = vrot.lane.b32.xlu0 %v1777, 32
    %v1781 = vpop.permute.xlu0 %1780
    %v1783 = vmul.f32 %v1776, %v1781
    %1785 = vrot.lane.b32.xlu0 %v1783, 32
    %v1786 = vpop.permute.xlu0 %1785
    %v1788 = vadd.f32 %v1778, %v1786
    %v1789 = vtanh.pop %v1788
    %1791 = vrot.lane.b32.xlu0 %v1789, 32
    %v1792 = vpop.permute.xlu0 %1791
    %v1794 = vmul.f32 %v1776, %v1792
    %1795 = vrot.lane.b32.xlu0 %v1683, 96
    %v1796 = vpop.permute.xlu0 %1795
    %1798 = vrot.lane.b32.xlu0 %v1683, 32
    %v1799 = vpop.permute.xlu0 %1798
    %v1801 = vsel %vm319, %v1686, %v1796
    %v1802 = vsel %vm325, %v1801, %v1683
    %v1803 = vsel %vm435, %v1802, %v1799
    %v1804 = vmul.f32 %v1803, %v117
    %v1805 = vadd.f32 %v215, %v439
    %1806 = vmatprep.subr.mxu0 0.0
    %1807 = vmatpush1.msra.mxu0 %v67
    %1808 = vmatprep.subr.mxu0 0.0
    %1809 = vmatpush1.msra.mxu0 %v68
    %1810 = vmatprep.subr.mxu0 0.0
    %1811 = vmatpush1.msra.mxu0 %v69
    %1812 = vmatprep.subr.mxu0 0.0
    %1813 = vmatpush1.msra.mxu0 %v70
    %1814 = vmatprep.subr.mxu0 0.0
    %1815 = vmatpush1.msra.mxu0 %v71
    %1816 = vmatprep.subr.mxu0 0.0
    %1817 = vmatpush1.msra.mxu0 %v72
    %1818 = vmatprep.subr.mxu0 0.0
    %1819 = vmatpush1.msra.mxu0 %v73
    %1820 = vmatprep.subr.mxu0 0.0
    %1821 = vmatpush1.msra.mxu0 %v74
    %1822 = vmatprep.subr.mxu0 0.0
    %1823 = vmatpush1.msra.mxu0 %v75
    %1824 = vmatprep.subr.mxu0 0.0
    %1825 = vmatpush1.msra.mxu0 %v76
    %1826 = vmatprep.subr.mxu0 0.0
    %1827 = vmatpush1.msra.mxu0 %v77
    %1828 = vmatprep.subr.mxu0 0.0
    %1829 = vmatpush1.msra.mxu0 %v78
    %1830 = vmatprep.subr.mxu0 0.0
    %1831 = vmatpush1.msra.mxu0 %v79
    %1832 = vmatprep.subr.mxu0 0.0
    %1833 = vmatpush1.msra.mxu0 %v80
    %1834 = vmatprep.subr.mxu0 0.0
    %1835 = vmatpush1.msra.mxu0 %v81
    %1836 = vmatprep.subr.mxu0 0.0
    %1837 = vmatpush1.msra.mxu0 %v82
    %1838 = vmatprep.subr.mxu0 0.0
    %1839 = vmatpush1.msra.mxu0 0.0
    %1840 = vmatprep.subr.mxu0 0.0
    %1841 = vmatpush1.msra.mxu0 0.0
    %1842 = vmatprep.subr.mxu0 0.0
    %1843 = vmatpush1.msra.mxu0 0.0
    %1844 = vmatprep.subr.mxu0 0.0
    %1845 = vmatpush1.msra.mxu0 0.0
    %1846 = vmatprep.subr.mxu0 0.0
    %1847 = vmatpush1.msra.mxu0 0.0
    %1848 = vmatprep.subr.mxu0 0.0
    %1849 = vmatpush1.msra.mxu0 0.0
    %1850 = vmatprep.subr.mxu0 0.0
    %1851 = vmatpush1.msra.mxu0 0.0
    %1852 = vmatprep.subr.mxu0 0.0
    %1853 = vmatpush1.msra.mxu0 0.0
    %1854 = vmatprep.subr.mxu0 0.0
    %1855 = vmatpush1.msra.mxu0 0.0
    %1856 = vmatprep.subr.mxu0 0.0
    %1857 = vmatpush1.msra.mxu0 0.0
    %1858 = vmatprep.subr.mxu0 0.0
    %1859 = vmatpush1.msra.mxu0 0.0
    %1860 = vmatprep.subr.mxu0 0.0
    %1861 = vmatpush1.msra.mxu0 0.0
    %1862 = vmatprep.subr.mxu0 0.0
    %1863 = vmatpush1.msra.mxu0 0.0
    %1864 = vmatprep.subr.mxu0 0.0
    %1865 = vmatpush1.msra.mxu0 0.0
    %1866 = vmatprep.subr.mxu0 0.0
    %1867 = vmatpush1.msra.mxu0 0.0
    %1868 = vmatprep.subr.mxu0 0.0
    %1869 = vmatpush1.msra.mxu0 0.0
    %1870 = vmatprep.mubr.f32.mxu0 0.0
    %1871 = vmatmul.mubr.f32.gmra.mrb[0].mxu0 %v1804
    %v1872 = vpop.f32.mrb[0].mxu0
    %v1873 = vadd.f32 0.0, %v1872
    %v1874 = vpop.f32.mrb[0].mxu0
    %1875 = vdwg.mxu0
    %v1877 = vrot.slane %v1873, 4
    %v1879 = vadd.f32 %v1805, %v1877
    %v1880 = vxor.u32 %v1879, 2147483648
    %v1881 = vmul.f32 %v1880, 1.442695
    %v1882 = vpow.pop %v1881
    %v1883 = vadd.f32 %v1882, 1.0
    %v1884 = vrcp.pop %v1883
    %v1885 = vmul.f32 1.0, %v1884
    %v1886 = vtanh.pop %v1879
    %v1888 = vrot.slane %v1677, 4
    %v1890 = vmul.f32 %v1885, %v1888
    %1892 = vrot.lane.b32.xlu0 %v1886, 32
    %v1893 = vpop.permute.xlu0 %1892
    %v1895 = vmul.f32 %v1885, %v1893
    %1897 = vrot.lane.b32.xlu0 %v1895, 32
    %v1898 = vpop.permute.xlu0 %1897
    %v1900 = vadd.f32 %v1890, %v1898
    %v1901 = vtanh.pop %v1900
    %1903 = vrot.lane.b32.xlu0 %v1901, 32
    %v1904 = vpop.permute.xlu0 %1903
    %v1906 = vmul.f32 %v1885, %v1904
    %1908 = vrot.lane.b32.xlu0 %v1906, 64
    %v1909 = vpop.permute.xlu0 %1908
    %v1912 = vrot.slane %v1794, 4
    %1913 = vrot.lane.b32.xlu0 %v1912, 96
    %v1914 = vpop.permute.xlu0 %1913
    %v1916 = vsel %vm319, %v1909, %v1914
    %1918 = vrot.lane.b32.xlu0 %v1916, 64
    %v1919 = vpop.permute.xlu0 %1918
    %v1921 = vsel %vm325, %v1916, %v1919
    %v1922 = vmul.f32 %v1921, %v558
    %v1923 = vmul.f32 %v1921, %v118
    %v1926 = vrot.slane %v1922, 4
    %v1927 = vrot.slane %v1923, 4
    %1930 = vmatprep.subr.mxu0 0.0
    %1931 = vmatpush1.msra.mxu0 %v84
    %1932 = vmatprep.subr.mxu0 0.0
    %1933 = vmatpush1.msra.mxu0 %v85
    %1934 = vmatprep.subr.mxu0 0.0
    %1935 = vmatpush1.msra.mxu0 %v86
    %1936 = vmatprep.subr.mxu0 0.0
    %1937 = vmatpush1.msra.mxu0 %v87
    %1938 = vmatprep.subr.mxu0 0.0
    %1939 = vmatpush1.msra.mxu0 %v88
    %1940 = vmatprep.subr.mxu0 0.0
    %1941 = vmatpush1.msra.mxu0 %v89
    %1942 = vmatprep.subr.mxu0 0.0
    %1943 = vmatpush1.msra.mxu0 %v90
    %1944 = vmatprep.subr.mxu0 0.0
    %1945 = vmatpush1.msra.mxu0 %v91
    %1946 = vmatprep.subr.mxu0 0.0
    %1947 = vmatpush1.msra.mxu0 %v92
    %1948 = vmatprep.subr.mxu0 0.0
    %1949 = vmatpush1.msra.mxu0 %v93
    %1950 = vmatprep.subr.mxu0 0.0
    %1951 = vmatpush1.msra.mxu0 %v94
    %1952 = vmatprep.subr.mxu0 0.0
    %1953 = vmatpush1.msra.mxu0 %v95
    %1954 = vmatprep.subr.mxu0 0.0
    %1955 = vmatpush1.msra.mxu0 %v96
    %1956 = vmatprep.subr.mxu0 0.0
    %1957 = vmatpush1.msra.mxu0 %v97
    %1958 = vmatprep.subr.mxu0 0.0
    %1959 = vmatpush1.msra.mxu0 %v98
    %1960 = vmatprep.subr.mxu0 0.0
    %1961 = vmatpush1.msra.mxu0 %v99
    %1962 = vmatprep.subr.mxu0 0.0
    %1963 = vmatpush1.msra.mxu0 %v100
    %1964 = vmatprep.subr.mxu0 0.0
    %1965 = vmatpush1.msra.mxu0 %v101
    %1966 = vmatprep.subr.mxu0 0.0
    %1967 = vmatpush1.msra.mxu0 %v102
    %1968 = vmatprep.subr.mxu0 0.0
    %1969 = vmatpush1.msra.mxu0 %v103
    %1970 = vmatprep.subr.mxu0 0.0
    %1971 = vmatpush1.msra.mxu0 %v104
    %1972 = vmatprep.subr.mxu0 0.0
    %1973 = vmatpush1.msra.mxu0 %v105
    %1974 = vmatprep.subr.mxu0 0.0
    %1975 = vmatpush1.msra.mxu0 %v106
    %1976 = vmatprep.subr.mxu0 0.0
    %1977 = vmatpush1.msra.mxu0 %v107
    %1978 = vmatprep.subr.mxu0 0.0
    %1979 = vmatpush1.msra.mxu0 %v108
    %1980 = vmatprep.subr.mxu0 0.0
    %1981 = vmatpush1.msra.mxu0 %v109
    %1982 = vmatprep.subr.mxu0 0.0
    %1983 = vmatpush1.msra.mxu0 %v110
    %1984 = vmatprep.subr.mxu0 0.0
    %1985 = vmatpush1.msra.mxu0 %v111
    %1986 = vmatprep.subr.mxu0 0.0
    %1987 = vmatpush1.msra.mxu0 %v112
    %1988 = vmatprep.subr.mxu0 0.0
    %1989 = vmatpush1.msra.mxu0 %v113
    %1990 = vmatprep.subr.mxu0 0.0
    %1991 = vmatpush1.msra.mxu0 %v114
    %1992 = vmatprep.subr.mxu0 0.0
    %1993 = vmatpush1.msra.mxu0 %v115
    %1994 = vmatprep.mubr.f32.mxu0 %v1927
    %1995 = vmatmul.mubr.f32.gmra.mrb[0].mxu0 %v1926
    %v1996 = vpop.f32.mrb[0].mxu0
    %v1997 = vadd.f32 0.0, %v1996
    %v1998 = vpop.f32.mrb[0].mxu0
    %1999 = vdwg.mxu0
    %v2000 = vadd.f32 %v116, %v1997
    %v2001 = vxor.u32 %v2000, 2147483648
    %v2002 = vmul.f32 %v2001, 1.442695
    %v2003 = vpow.pop %v2002
    %v2004 = vadd.f32 %v2003, 1.0
    %v2005 = vrcp.pop %v2004
    %v2006 = vmul.f32 1.0, %v2005
    %v2007 = vtanh.pop %v2000
    %v2008 = vmul.f32 %v2006, %v1788
    %2010 = vrot.lane.b32.xlu0 %v2007, 32
    %v2011 = vpop.permute.xlu0 %2010
    %v2013 = vmul.f32 %v2006, %v2011
    %2015 = vrot.lane.b32.xlu0 %v2013, 32
    %v2016 = vpop.permute.xlu0 %2015
    %v2018 = vadd.f32 %v2008, %v2016
    %v2019 = vtanh.pop %v2018
    %2021 = vrot.lane.b32.xlu0 %v2019, 32
    %v2022 = vpop.permute.xlu0 %2021
    %v2024 = vmul.f32 %v2006, %v2022
    %v2026 = vlaneseq
    %v2027 = vshrl.u32 %v2026, 7
    %v2028 = vsub.s32 0, %v2027
    %v2029 = vrot.slane %v119, %v2028
    %2030 = vrot.lane.b32.xlu0 %v2029, 64
    %v2031 = vpop.permute.xlu0 %2030
    %v2033 = vmul.f32 %v2024, %v2031
    %2035 = vrot.lane.b32.xlu0 %v2033, 64
    %v2036 = vpop.permute.xlu0 %2035
    %vm2038 = vcmask 257024
    %v2039 = vsel %vm2038, %v2036, 0.0
    %2040 = vadd.xlane.f32.xlu0 %v2039
    %v2041 = vpop.xlane.xlu0 %2040
    %v2042 = vmul.f32 %v2024, %v2024
    %2044 = vrot.lane.b32.xlu0 %v2042, 64
    %v2045 = vpop.permute.xlu0 %2044
    %v2047 = vsel %vm2038, %v2045, 0.0
    %2048 = vadd.xlane.f32.xlu0 %v2047
    %v2049 = vpop.xlane.xlu0 %2048
    %v2050 = vmul.f32 %v119, %v119
    %vm2051 = vcmask 253952
    %v2052 = vsel %vm2051, %v2050, 0.0
    %2053 = vadd.xlane.f32.xlu0 %v2052
    %v2054 = vpop.xlane.xlu0 %2053
    %v2055 = vlaneseq
    %v2056 = vshrl.u32 %v2055, 7
    %v2057 = vsub.s32 0, %v2056
    %v2058 = vrot.slane %v2054, %v2057
    %v2059 = vmul.f32 %v2049, %v2058
    %v2060 = vmax.f32 %v2059, 1e-16
    %v2061 = vrsqrt.pop %v2060
    %v2062 = vmul.f32 %v2041, %v2061
    %vm2063 = vcmask 1043456
    %v2064 = vsel %vm2063, %v2062, -inf
    %v2065 = vrot.slane %v2064, 4
    %v2066 = vmax.f32 %v2064, %v2065
    %v2067 = vrot.slane %v2066, 2
    %v2068 = vmax.f32 %v2066, %v2067
    %v2069 = vrot.slane %v2068, 1
    %v2070 = vmax.f32 %v2068, %v2069
    %v2071 = vsub.f32 %v2062, %v2070
    %v2072 = vmul.f32 %v2071, 1.442695
    %v2073 = vpow.pop %v2072
    %v2074 = vsel %vm2063, %v2073, 0.0
    %v2075 = vrot.slane %v2074, 4
    %v2076 = vadd.f32 %v2074, %v2075
    %v2077 = vrot.slane %v2076, 2
    %v2078 = vadd.f32 %v2076, %v2077
    %v2079 = vrot.slane %v2078, 1
    %v2080 = vadd.f32 %v2078, %v2079
    %v2081 = vrcp.pop %v2080
    %v2082 = vmul.f32 %v2080, %v2081
    %v2083 = vsub.f32 2.0, %v2082
    %v2084 = vmul.f32 %v2081, %v2083
    %v2085 = vmul.f32 %v2073, %v2084
    %v2086 = vmul.f32 %v2085, %v2024
    %vm2087 = vcmask 781824
    %v2088 = vsel %vm2087, %v2086, 0.0
    %v2089 = vrot.slane %v2088, 4
    %v2090 = vadd.f32 %v2088, %v2089
    %v2091 = vrot.slane %v2090, 2
    %v2092 = vadd.f32 %v2090, %v2091
    %v2093 = vrot.slane %v2092, 1
    %v2094 = vadd.f32 %v2092, %v2093
    %2096 = vrot.lane.b32.xlu0 %v2094, 64
    %v2097 = vpop.permute.xlu0 %2096
    %2099 = vst.msk [vmem:[#allocation7] sm:$0x1] %vm2051, %v2097
    // Predicated region
    $region46: #{tpu_custom_call.1} parent=1 // pred_check
      _
    $region47: #{tpu_custom_call.1} parent=1 // pred_check_branch
      %2101 = sbr.rel (0) target = $region49
    $region48: #{tpu_custom_call.1} parent=1 // pred_region
      %s2103 = ssub.s32 16, 16
      %2104 = vsyncadd [#allocation4], %s2103
      %s2106 = sshll.u32 [#allocation7], 4
      %s2107 = int_to_ptr.vmem [resolvable:$true] %s2106
      %2109 = dma.vmem_to_hbm [thread:$0]  %s2107, 16, %s9, [#allocation4]
    $region49: #{tpu_custom_call.1} parent=1 // pred_fallthru
      _
    // Predicated region
    $region50: #{tpu_custom_call.1} parent=1 // pred_check
      _
    $region51: #{tpu_custom_call.1} parent=1 // pred_check_branch
      %2111 = sbr.rel (0) target = $region53
    $region52: #{tpu_custom_call.1} parent=1 // pred_region
      %2112 = dma.done [#allocation4], 16
    $region53: #{tpu_custom_call.1} parent=1 // pred_fallthru
      _
    %2113 = vsyncpa [#allocation3], 1
    %2114 = vsyncpa [#allocation6], 1
    %2115 = vsyncpa [#allocation4], 1

</llo_original>
